<compile_context>
chip_gen: v5e
topology: v5e:2x2
jax: 0.10.0
libtpu: 0.0.40
codegen_flags: <defaults>
</compile_context>

<pallas_src>
import jax
import jax.numpy as jnp
from jax.experimental import pallas as pl
from jax.experimental.pallas import tpu as pltpu


def _gin_kernel(x_ref, idx_ref, w_ref, b_ref, eps_ref, o_ref):
    # x_ref  : (N_p, C_in)      one batch's node features, channels-last
    # idx_ref: (N_p, K)         int32 neighbor indices (batch-local, in [0, N))
    # w_ref  : (C_in, C_out_p)  pre-transposed 1x1-conv weight, C_out padded to 128
    # b_ref  : (1, C_out_p)     conv bias (padded)
    # eps_ref: (1,) f32 in SMEM
    # o_ref  : (N_p, C_out_p)
    n, k = idx_ref.shape
    x = x_ref[...].astype(jnp.float32)

    # Neighbor-sum as a dense (N,N) adjacency matmul.  Compare slabs are
    # accumulated in int32 and converted to f32 once (no per-slab f32 pass);
    # no diagonal build — the self term is added after the matmul.
    col = jax.lax.broadcasted_iota(jnp.int32, (n, n), 1)
    idx = idx_ref[...]
    acc = jnp.zeros((n, n), dtype=jnp.int32)
    for j in range(k):                       # K small & static -> unrolled
        acc = acc + (idx[:, j:j + 1] == col).astype(jnp.int32)
    adj = acc.astype(jnp.float32)

    # Explicit precision makes the MXU f32 pass count deterministic for the
    # 1e-4 parity check.  (adj entries are exact small integers, so a
    # reduced-pass bf16-LHS matmul is lossless on that operand if parity
    # requirements are ever relaxed.)
    agg = jnp.dot(adj, x, preferred_element_type=jnp.float32,
                  precision=jax.lax.Precision.HIGHEST)           # (N_p, C_in)
    agg = agg + (1.0 + eps_ref[0]) * x                            # GIN self term
    out = jnp.dot(agg, w_ref[...], preferred_element_type=jnp.float32,
                  precision=jax.lax.Precision.HIGHEST)            # (N_p, C_out_p)
    out = out + b_ref[...]
    o_ref[...] = jnp.maximum(out, 0.0).astype(o_ref.dtype)


def _round_up(v, m):
    return ((v + m - 1) // m) * m


def gin_conv2d_forward(x_nchw, edge_index, weight, bias, eps):
    """x_nchw: (B, C_in, N, 1); edge_index: (2, B, N, K) -> (B, C_out, N, 1)."""
    B, C_in, N, _ = x_nchw.shape
    C_out = weight.shape[0]
    K = edge_index.shape[-1]

    N_p = _round_up(N, 8)          # sublane alignment of the per-batch block
    C_out_p = _round_up(C_out, 128)  # lane-dense (unmasked) output stores

    # channels-last node rows; only the node (sublane) axis is padded.  The
    # channel axis stays unpadded in HBM (full-dim last axis in the BlockSpec
    # is legal), avoiding a 4x-padded x copy / read.
    x_rows = jnp.transpose(x_nchw[..., 0], (0, 2, 1))             # (B, N, C_in)
    idx = edge_index[0].astype(jnp.int32)                         # (B, N, K)
    if N_p != N:
        x_rows = jnp.pad(x_rows, ((0, 0), (0, N_p - N), (0, 0)))
        idx = jnp.pad(idx, ((0, 0), (0, N_p - N), (0, 0)))
    x_rows = x_rows.reshape(B * N_p, C_in)
    idx = idx.reshape(B * N_p, K)

    # Pre-transpose + zero-pad weight / bias (padded output channels stay zero
    # and are sliced away after the kernel).
    w_p = jnp.pad(weight.T.astype(jnp.float32), ((0, 0), (0, C_out_p - C_out)))
    b_p = jnp.pad(bias.astype(jnp.float32),
                  (0, C_out_p - C_out)).reshape(1, C_out_p)
    eps1 = jnp.asarray(eps, jnp.float32).reshape(1)

    out_p = pl.pallas_call(
        _gin_kernel,
        out_shape=jax.ShapeDtypeStruct((B * N_p, C_out_p), x_nchw.dtype),
        grid_spec=pltpu.PrefetchScalarGridSpec(
            num_scalar_prefetch=0,
            grid=(B,),                                    # >= 2 -> both v7x TCs
            in_specs=[
                pl.BlockSpec((N_p, C_in), lambda b: (b, 0)),
                pl.BlockSpec((N_p, K), lambda b: (b, 0)),
                pl.BlockSpec((C_in, C_out_p), lambda b: (0, 0)),
                pl.BlockSpec((1, C_out_p), lambda b: (0, 0)),
                pl.BlockSpec(memory_space=pltpu.MemorySpace.SMEM),
            ],
            out_specs=pl.BlockSpec((N_p, C_out_p), lambda b: (b, 0)),
        ),
        compiler_params=pltpu.CompilerParams(
            dimension_semantics=("parallel",)),
    )(x_rows, idx, w_p, b_p, eps1)

    # Output layout plumbing kept only to honor the NCHW module contract.
    out = out_p.reshape(B, N_p, C_out_p)[:, :N, :C_out]
    return jnp.transpose(out, (0, 2, 1))[..., None]               # (B, C_out, N, 1)


def gin_conv2d_reference(x_nchw, edge_index, weight, bias, eps):
    """Plain-JAX reference mirroring the PyTorch forward."""
    idx = edge_index[0]                                           # (B, N, K)
    x_sq = x_nchw[..., 0]                                         # (B, C, N)
    x_j = jax.vmap(lambda xb, ib: xb[:, ib])(x_sq, idx)           # (B, C, N, K)
    x_j = jnp.sum(x_j, axis=-1, keepdims=True)                    # (B, C, N, 1)
    h = (1.0 + eps) * x_nchw + x_j
    out = jnp.einsum('oc,bcnw->bonw', weight, h,
                     precision='highest') + bias[None, :, None, None]
    return jnp.maximum(out, 0.0)


if __name__ == "__main__":
    B, C_in, C_out, N, K = 2, 32, 32, 64, 8

    key = jax.random.PRNGKey(0)
    kx, kidx, kw, kb = jax.random.split(key, 4)

    x = jax.random.normal(kx, (B, C_in, N, 1), dtype=jnp.float32)
    edge_index = jax.random.randint(kidx, (2, B, N, K), 0, N, dtype=jnp.int32)

    # Deterministic parameter init (PyTorch Conv2d-style uniform bounds).
    bound = 1.0 / (C_in ** 0.5)
    weight = jax.random.uniform(kw, (C_out, C_in), jnp.float32, -bound, bound)
    bias = jax.random.uniform(kb, (C_out,), jnp.float32, -bound, bound)
    eps = jnp.array(0.0, dtype=jnp.float32)   # eps_init = 0.0

    out = gin_conv2d_forward(x, edge_index, weight, bias, eps)
    out = jax.block_until_ready(out)

    ref = gin_conv2d_reference(x, edge_index, weight, bias, eps)
    assert out.shape == (B, C_out, N, 1)
    assert jnp.allclose(out, ref, atol=1e-4, rtol=1e-4)

    print("KERNEL_OK")
</pallas_src>

<mosaic_0001>
module attributes {stable_mosaic.version = 11 : i64} {
  func.func @_gin_kernel(%arg0: i32, %arg1: memref<64x32xf32, #tpu.memory_space<vmem>>, %arg2: memref<64x8xi32, #tpu.memory_space<vmem>>, %arg3: memref<32x128xf32, #tpu.memory_space<vmem>>, %arg4: memref<1x128xf32, #tpu.memory_space<vmem>>, %arg5: memref<1xf32, #tpu.memory_space<smem>>, %arg6: memref<64x128xf32, #tpu.memory_space<vmem>>) attributes {dimension_semantics = [#tpu.dimension_semantics<parallel>], iteration_bounds = array<i64: 2>, scalar_prefetch = 0 : i64, scratch_operands = 0 : i64, tpu.core_type = #tpu.core_type<tc>, window_params = [{transform_indices = @transform_0, window_bounds = array<i64: 64, 32>}, {transform_indices = @transform_1, window_bounds = array<i64: 64, 8>}, {pipeline_mode = #tpu.pipeline_mode<synchronous>, transform_indices = @transform_2, window_bounds = array<i64: 32, 128>}, {pipeline_mode = #tpu.pipeline_mode<synchronous>, transform_indices = @transform_3, window_bounds = array<i64: 1, 128>}, {transform_indices = @transform_4, window_bounds = array<i64: 1>}, {transform_indices = @transform_5, window_bounds = array<i64: 64, 128>}]} {
    %c0 = arith.constant 0 : index
    %c0_0 = arith.constant 0 : index
    %0 = vector.load %arg1[%c0, %c0_0] : memref<64x32xf32, #tpu.memory_space<vmem>>, vector<64x32xf32>
    %1 = tpu.iota {dimensions = array<i32: 1>} : vector<64x64xi32>
    %c0_1 = arith.constant 0 : index
    %c0_2 = arith.constant 0 : index
    %2 = vector.load %arg2[%c0_1, %c0_2] : memref<64x8xi32, #tpu.memory_space<vmem>>, vector<64x8xi32>
    %c0_i32 = arith.constant 0 : i32
    %3 = vector.broadcast %c0_i32 : i32 to vector<64x64xi32>
    %4 = vector.extract_strided_slice %2 {offsets = [0, 0], sizes = [64, 1], strides = [1, 1]} : vector<64x8xi32> to vector<64x1xi32>
    %5 = vector.broadcast %4 : vector<64x1xi32> to vector<64x64xi32>
    %6 = arith.cmpi eq, %5, %1 : vector<64x64xi32>
    %7 = arith.extui %6 : vector<64x64xi1> to vector<64x64xi32>
    %8 = arith.addi %3, %7 : vector<64x64xi32>
    %9 = vector.extract_strided_slice %2 {offsets = [0, 1], sizes = [64, 1], strides = [1, 1]} : vector<64x8xi32> to vector<64x1xi32>
    %10 = vector.broadcast %9 : vector<64x1xi32> to vector<64x64xi32>
    %11 = arith.cmpi eq, %10, %1 : vector<64x64xi32>
    %12 = arith.extui %11 : vector<64x64xi1> to vector<64x64xi32>
    %13 = arith.addi %8, %12 : vector<64x64xi32>
    %14 = vector.extract_strided_slice %2 {offsets = [0, 2], sizes = [64, 1], strides = [1, 1]} : vector<64x8xi32> to vector<64x1xi32>
    %15 = vector.broadcast %14 : vector<64x1xi32> to vector<64x64xi32>
    %16 = arith.cmpi eq, %15, %1 : vector<64x64xi32>
    %17 = arith.extui %16 : vector<64x64xi1> to vector<64x64xi32>
    %18 = arith.addi %13, %17 : vector<64x64xi32>
    %19 = vector.extract_strided_slice %2 {offsets = [0, 3], sizes = [64, 1], strides = [1, 1]} : vector<64x8xi32> to vector<64x1xi32>
    %20 = vector.broadcast %19 : vector<64x1xi32> to vector<64x64xi32>
    %21 = arith.cmpi eq, %20, %1 : vector<64x64xi32>
    %22 = arith.extui %21 : vector<64x64xi1> to vector<64x64xi32>
    %23 = arith.addi %18, %22 : vector<64x64xi32>
    %24 = vector.extract_strided_slice %2 {offsets = [0, 4], sizes = [64, 1], strides = [1, 1]} : vector<64x8xi32> to vector<64x1xi32>
    %25 = vector.broadcast %24 : vector<64x1xi32> to vector<64x64xi32>
    %26 = arith.cmpi eq, %25, %1 : vector<64x64xi32>
    %27 = arith.extui %26 : vector<64x64xi1> to vector<64x64xi32>
    %28 = arith.addi %23, %27 : vector<64x64xi32>
    %29 = vector.extract_strided_slice %2 {offsets = [0, 5], sizes = [64, 1], strides = [1, 1]} : vector<64x8xi32> to vector<64x1xi32>
    %30 = vector.broadcast %29 : vector<64x1xi32> to vector<64x64xi32>
    %31 = arith.cmpi eq, %30, %1 : vector<64x64xi32>
    %32 = arith.extui %31 : vector<64x64xi1> to vector<64x64xi32>
    %33 = arith.addi %28, %32 : vector<64x64xi32>
    %34 = vector.extract_strided_slice %2 {offsets = [0, 6], sizes = [64, 1], strides = [1, 1]} : vector<64x8xi32> to vector<64x1xi32>
    %35 = vector.broadcast %34 : vector<64x1xi32> to vector<64x64xi32>
    %36 = arith.cmpi eq, %35, %1 : vector<64x64xi32>
    %37 = arith.extui %36 : vector<64x64xi1> to vector<64x64xi32>
    %38 = arith.addi %33, %37 : vector<64x64xi32>
    %39 = vector.extract_strided_slice %2 {offsets = [0, 7], sizes = [64, 1], strides = [1, 1]} : vector<64x8xi32> to vector<64x1xi32>
    %40 = vector.broadcast %39 : vector<64x1xi32> to vector<64x64xi32>
    %41 = arith.cmpi eq, %40, %1 : vector<64x64xi32>
    %42 = arith.extui %41 : vector<64x64xi1> to vector<64x64xi32>
    %43 = arith.addi %38, %42 : vector<64x64xi32>
    %44 = arith.sitofp %43 : vector<64x64xi32> to vector<64x64xf32>
    %cst = arith.constant dense<0.000000e+00> : vector<64x32xf32>
    %45 = tpu.matmul %44, %0, %cst {dimension_numbers = #tpu.dot_dimension_numbers<[1], [0], [0], [1], [0, 0, 1, 1], [], []>, precision = #tpu.contract_precision<fp32>} : vector<64x64xf32>, vector<64x32xf32>, vector<64x32xf32> -> vector<64x32xf32>
    %c0_3 = arith.constant 0 : index
    %46 = memref.load %arg5[%c0_3] : memref<1xf32, #tpu.memory_space<smem>>
    %cst_4 = arith.constant 1.000000e+00 : f32
    %47 = arith.addf %cst_4, %46 : f32
    %48 = vector.broadcast %47 : f32 to vector<64x32xf32>
    %49 = arith.mulf %48, %0 : vector<64x32xf32>
    %50 = arith.addf %45, %49 : vector<64x32xf32>
    %c0_5 = arith.constant 0 : index
    %c0_6 = arith.constant 0 : index
    %51 = vector.load %arg3[%c0_5, %c0_6] : memref<32x128xf32, #tpu.memory_space<vmem>>, vector<32x128xf32>
    %cst_7 = arith.constant dense<0.000000e+00> : vector<64x128xf32>
    %52 = tpu.matmul %50, %51, %cst_7 {dimension_numbers = #tpu.dot_dimension_numbers<[1], [0], [0], [1], [0, 0, 1, 1], [], []>, precision = #tpu.contract_precision<fp32>} : vector<64x32xf32>, vector<32x128xf32>, vector<64x128xf32> -> vector<64x128xf32>
    %c0_8 = arith.constant 0 : index
    %c0_9 = arith.constant 0 : index
    %53 = vector.load %arg4[%c0_8, %c0_9] : memref<1x128xf32, #tpu.memory_space<vmem>>, vector<1x128xf32>
    %54 = vector.broadcast %53 : vector<1x128xf32> to vector<64x128xf32>
    %55 = arith.addf %52, %54 : vector<64x128xf32>
    %cst_10 = arith.constant 0.000000e+00 : f32
    %56 = vector.broadcast %cst_10 : f32 to vector<64x128xf32>
    %57 = arith.maximumf %55, %56 : vector<64x128xf32>
    %c0_11 = arith.constant 0 : index
    %c0_12 = arith.constant 0 : index
    %58 = vector.load %arg6[%c0_11, %c0_12] : memref<64x128xf32, #tpu.memory_space<vmem>>, vector<64x128xf32>
    tpu.vector_store %arg6[%c0_11, %c0_12], %57 {strides = array<i32>} : memref<64x128xf32, #tpu.memory_space<vmem>>, vector<64x128xf32>,
    return
  }
  func.func @transform_0(%arg0: i32) -> (i32, i32) {
    %c0_i32 = arith.constant 0 : i32
    %c0_i32_0 = arith.constant 0 : i32
    return %arg0, %c0_i32 : i32, i32
  }
  func.func @transform_1(%arg0: i32) -> (i32, i32) {
    %c0_i32 = arith.constant 0 : i32
    %c0_i32_0 = arith.constant 0 : i32
    return %arg0, %c0_i32 : i32, i32
  }
  func.func @transform_2(%arg0: i32) -> (i32, i32) {
    %c0_i32 = arith.constant 0 : i32
    %c0_i32_0 = arith.constant 0 : i32
    %c0_i32_1 = arith.constant 0 : i32
    return %c0_i32, %c0_i32_0 : i32, i32
  }
  func.func @transform_3(%arg0: i32) -> (i32, i32) {
    %c0_i32 = arith.constant 0 : i32
    %c0_i32_0 = arith.constant 0 : i32
    %c0_i32_1 = arith.constant 0 : i32
    return %c0_i32, %c0_i32_0 : i32, i32
  }
  func.func @transform_4(%arg0: i32) -> i32 {
    %c0_i32 = arith.constant 0 : i32
    %c0_i32_0 = arith.constant 0 : i32
    return %c0_i32 : i32
  }
  func.func @transform_5(%arg0: i32) -> (i32, i32) {
    %c0_i32 = arith.constant 0 : i32
    %c0_i32_0 = arith.constant 0 : i32
    return %arg0, %c0_i32 : i32, i32
  }
}

</mosaic_0001>

<llo_original>
// kernel: tpu_custom_call.1
$region0: #{tpu_custom_call.1}
  #allocation0 [shape = 'u32[]', space=smem, size = 0x4, offset = 0x4, fixed_abs, tag = 'smem constant byte address 0x4 - core index']
  #allocation1 [shape = 'u32[72,128]{1,0:T(1,128)}', space=vmem, size = 0x9000, scoped, tag = 'internal scratch']
  #allocation2 [shape = 'f32[1]{0:T(128)S(6)}', space=smem, size = 0x200, scoped, tag = 'scoped memory for tpu_custom_call.1']
  %s0 = inlined_call_operand.vmem [shape: f32[128,32], index: 0, kind: input, shape index: {}]
  %s1 = inlined_call_operand.vmem [shape: s32[128,8], index: 1, kind: input, shape index: {}]
  %s2 = inlined_call_operand.vmem [shape: f32[32,128], index: 2, kind: input, shape index: {}]
  %s3 = inlined_call_operand.vmem [shape: f32[1,128], index: 3, kind: input, shape index: {}]
  %s4 = inlined_call_operand.<no memory space> [shape: f32[1], index: 4, kind: input, shape index: {}]
  %s5 = inlined_call_operand.hbm [shape: f32[128,128], index: 5, kind: output, shape index: {}]
  %s6 = sld [smem:[#allocation0]]
  $region53: #{tpu_custom_call.1} parent=0
    _
  %s8 = ssub.s32 1, %s6
  %s9 = scalar_select 0, %s8, %s6
  %10 = sst [smem:[#allocation2]] %s4
  $region1: #{tpu_custom_call.1} parent=0
    #allocation3 [shape = 'u8[65536]{0}', space=vmem, size = 0x10000, scoped, tag = 'output window, operand 0']
    #allocation4 [shape = 's32[2]{0}', space=sflag, size = 0x8, scoped, tag = 'scoped memory for tpu_custom_call.1']
    %11 = vsyncpa [#allocation4], 0
    %s12 = scalar_lea.sflag [#allocation4], 1
    %13 = vsyncpa %s12, 0
    loop: start=0, step=1, limit=4
    $region2: #{tpu_custom_call.1} parent=1 // loop_pre_header
      _
    $region3: #{tpu_custom_call.1} parent=1 // loop_header
      %s15 = sphi 0, %s19
      %p16 = scmp.ge.s32.totalorder %s15, 4
      %s25 = sphi 0, %s27
      %s28 = sphi 0, %s25
      %s29 = sphi 0, %s28
      %s45 = sphi 0, %s29
      %s51 = sphi 0, %s53
      %s54 = sphi 0, %s51
      %s55 = sphi 0, %s54
      %s71 = sphi 0, %s55
      %s75 = sphi 0, %s75
      %s77 = sphi 0, %s75
      %s78 = sphi 0, %s77
      %s92 = sphi 0, %s78
      %s96 = sphi 0, %s96
      %s98 = sphi 0, %s96
      %s99 = sphi 0, %s98
      %s113 = sphi 0, %s99
      %s117 = sphi 0, %s117
      %s119 = sphi 0, %s117
      %s120 = sphi 0, %s119
      %s134 = sphi 0, %s120
      %s140 = sphi 0, %s142
      %s143 = sphi 0, %s140
      %s144 = sphi 0, %s143
      %s160 = sphi 0, %s144
    $region4: #{tpu_custom_call.1} parent=1 // loop_header_branch
      %18 = sbr.rel (%p16) target = $region8
    $region5: #{tpu_custom_call.1} parent=1 // loop_body
      %s20 = ssub.s32 %s15, 1
      %s21 = ssub.s32 %s15, 2
      %s22 = sadd.s32 %s15, 1
      %s23 = ssub.s32 %s15, %s22
      %p24 = scmp.eq.s32.totalorder %s23, 0
      %s26 = sadd.s32 %s25, 1
      %s27 = scalar_select %p24, %s25, %s26
      %p30 = pneg %p24
      %p31 = scmp.eq.s32.totalorder %s15, 1
      %p32 = por %p30, %p31
      %p33 = scmp.ne.s32.totalorder %s25, %s28
      %p34 = scmp.eq.s32.totalorder %s15, 0
      %p35 = por %p33, %p34
      %p36 = scmp.ne.s32.totalorder %s25, %s28
      %p37 = scmp.eq.s32.totalorder %s20, 1
      %p38 = por %p36, %p37
      %p39 = scmp.ne.s32.totalorder %s28, %s29
      %p40 = scmp.eq.s32.totalorder %s20, 0
      %p41 = por %p39, %p40
      %p42 = scmp.ne.s32.totalorder %s28, %s29
      %p43 = scmp.eq.s32.totalorder %s21, 1
      %p44 = por %p42, %p43
      %p46 = scmp.ne.s32.totalorder %s29, %s45
      %p47 = scmp.eq.s32.totalorder %s21, 0
      %p48 = por %p46, %p47
      %s49 = ssub.s32 %s15, %s22
      %p50 = scmp.eq.s32.totalorder %s49, 0
      %s52 = sadd.s32 %s51, 1
      %s53 = scalar_select %p50, %s51, %s52
      %p56 = pneg %p50
      %p57 = scmp.eq.s32.totalorder %s15, 1
      %p58 = por %p56, %p57
      %p59 = scmp.ne.s32.totalorder %s51, %s54
      %p60 = scmp.eq.s32.totalorder %s15, 0
      %p61 = por %p59, %p60
      %p62 = scmp.ne.s32.totalorder %s51, %s54
      %p63 = scmp.eq.s32.totalorder %s20, 1
      %p64 = por %p62, %p63
      %p65 = scmp.ne.s32.totalorder %s54, %s55
      %p66 = scmp.eq.s32.totalorder %s20, 0
      %p67 = por %p65, %p66
      %p68 = scmp.ne.s32.totalorder %s54, %s55
      %p69 = scmp.eq.s32.totalorder %s21, 1
      %p70 = por %p68, %p69
      %p72 = scmp.ne.s32.totalorder %s55, %s71
      %p73 = scmp.eq.s32.totalorder %s21, 0
      %p74 = por %p72, %p73
      %s76 = sadd.s32 %s75, 1
      %p79 = scmp.eq.s32.totalorder %s15, 1
      %p80 = scmp.ne.s32.totalorder %s75, %s77
      %p81 = scmp.eq.s32.totalorder %s15, 0
      %p82 = por %p80, %p81
      %p83 = scmp.ne.s32.totalorder %s75, %s77
      %p84 = scmp.eq.s32.totalorder %s20, 1
      %p85 = por %p83, %p84
      %p86 = scmp.ne.s32.totalorder %s77, %s78
      %p87 = scmp.eq.s32.totalorder %s20, 0
      %p88 = por %p86, %p87
      %p89 = scmp.ne.s32.totalorder %s77, %s78
      %p90 = scmp.eq.s32.totalorder %s21, 1
      %p91 = por %p89, %p90
      %p93 = scmp.ne.s32.totalorder %s78, %s92
      %p94 = scmp.eq.s32.totalorder %s21, 0
      %p95 = por %p93, %p94
      %s97 = sadd.s32 %s96, 1
      %p100 = scmp.eq.s32.totalorder %s15, 1
      %p101 = scmp.ne.s32.totalorder %s96, %s98
      %p102 = scmp.eq.s32.totalorder %s15, 0
      %p103 = por %p101, %p102
      %p104 = scmp.ne.s32.totalorder %s96, %s98
      %p105 = scmp.eq.s32.totalorder %s20, 1
      %p106 = por %p104, %p105
      %p107 = scmp.ne.s32.totalorder %s98, %s99
      %p108 = scmp.eq.s32.totalorder %s20, 0
      %p109 = por %p107, %p108
      %p110 = scmp.ne.s32.totalorder %s98, %s99
      %p111 = scmp.eq.s32.totalorder %s21, 1
      %p112 = por %p110, %p111
      %p114 = scmp.ne.s32.totalorder %s99, %s113
      %p115 = scmp.eq.s32.totalorder %s21, 0
      %p116 = por %p114, %p115
      %s118 = sadd.s32 %s117, 1
      %p121 = scmp.eq.s32.totalorder %s15, 1
      %p122 = scmp.ne.s32.totalorder %s117, %s119
      %p123 = scmp.eq.s32.totalorder %s15, 0
      %p124 = por %p122, %p123
      %p125 = scmp.ne.s32.totalorder %s117, %s119
      %p126 = scmp.eq.s32.totalorder %s20, 1
      %p127 = por %p125, %p126
      %p128 = scmp.ne.s32.totalorder %s119, %s120
      %p129 = scmp.eq.s32.totalorder %s20, 0
      %p130 = por %p128, %p129
      %p131 = scmp.ne.s32.totalorder %s119, %s120
      %p132 = scmp.eq.s32.totalorder %s21, 1
      %p133 = por %p131, %p132
      %p135 = scmp.ne.s32.totalorder %s120, %s134
      %p136 = scmp.eq.s32.totalorder %s21, 0
      %p137 = por %p135, %p136
      %s138 = ssub.s32 %s15, %s22
      %p139 = scmp.eq.s32.totalorder %s138, 0
      %s141 = sadd.s32 %s140, 1
      %s142 = scalar_select %p139, %s140, %s141
      %p145 = pneg %p139
      %p146 = scmp.eq.s32.totalorder %s15, 1
      %p147 = por %p145, %p146
      %p148 = scmp.ne.s32.totalorder %s140, %s143
      %p149 = scmp.eq.s32.totalorder %s15, 0
      %p150 = por %p148, %p149
      %p151 = scmp.ne.s32.totalorder %s140, %s143
      %p152 = scmp.eq.s32.totalorder %s20, 1
      %p153 = por %p151, %p152
      %p154 = scmp.ne.s32.totalorder %s143, %s144
      %p155 = scmp.eq.s32.totalorder %s20, 0
      %p156 = por %p154, %p155
      %p157 = scmp.ne.s32.totalorder %s143, %s144
      %p158 = scmp.eq.s32.totalorder %s21, 1
      %p159 = por %p157, %p158
      %p161 = scmp.ne.s32.totalorder %s144, %s160
      %p162 = scmp.eq.s32.totalorder %s21, 0
      %p163 = por %p161, %p162
      %p164 = scmp.le.s32.totalorder 1, %s15
      %p165 = scmp.lt.s32.totalorder %s15, 3
      %p166 = pnand %p164, %p165
      %p167 = pneg %p166
      // Predicated region
      $region9: #{tpu_custom_call.1} parent=5 // pred_check
        _
      $region10: #{tpu_custom_call.1} parent=5 // pred_check_branch
        %169 = sbr.rel (%p166) target = $region12
      $region11: #{tpu_custom_call.1} parent=5 // pred_region
        %s170 = ssub.s32 %s15, 1
        // Predicated region
        $region13: #{tpu_custom_call.1} parent=11 // pred_check
          %p171 = pneg %p88
        $region14: #{tpu_custom_call.1} parent=11 // pred_check_branch
          %173 = sbr.rel (%p171) target = $region16
        $region15: #{tpu_custom_call.1} parent=11 // pred_region
          _
        $region16: #{tpu_custom_call.1} parent=11 // pred_fallthru
          _
        // Predicated region
        $region17: #{tpu_custom_call.1} parent=11 // pred_check
          %p174 = pneg %p109
        $region18: #{tpu_custom_call.1} parent=11 // pred_check_branch
          %176 = sbr.rel (%p174) target = $region20
        $region19: #{tpu_custom_call.1} parent=11 // pred_region
          _
        $region20: #{tpu_custom_call.1} parent=11 // pred_fallthru
          _
        // Predicated region
        $region21: #{tpu_custom_call.1} parent=11 // pred_check
          %p177 = pneg %p130
        $region22: #{tpu_custom_call.1} parent=11 // pred_check_branch
          %179 = sbr.rel (%p177) target = $region24
        $region23: #{tpu_custom_call.1} parent=11 // pred_region
          _
        $region24: #{tpu_custom_call.1} parent=11 // pred_fallthru
          _
      $region12: #{tpu_custom_call.1} parent=5 // pred_fallthru
        _
      %p180 = scmp.lt.s32.totalorder %s15, 2
      // Predicated region
      $region25: #{tpu_custom_call.1} parent=5 // pred_check
        %p181 = pneg %p180
      $region26: #{tpu_custom_call.1} parent=5 // pred_check_branch
        %183 = sbr.rel (%p181) target = $region28
      $region27: #{tpu_custom_call.1} parent=5 // pred_region
        // Predicated region
        $region29: #{tpu_custom_call.1} parent=27 // pred_check
          %p184 = pneg %p35
        $region30: #{tpu_custom_call.1} parent=27 // pred_check_branch
          %186 = sbr.rel (%p184) target = $region32
        $region31: #{tpu_custom_call.1} parent=27 // pred_region
          %s187 = smul.u32 8, %s15
          %p188 = scmp.lt.s32.totalorder %s187, 15
          %s189 = scalar_select %p188, %s187, 15
          %s190 = smul.addr %s189, 8
          %s191 = scalar_lea.vmem %s0, %s190
          %s192 = smul.u32 8, %s15
        $region32: #{tpu_custom_call.1} parent=27 // pred_fallthru
          _
        // Predicated region
        $region33: #{tpu_custom_call.1} parent=27 // pred_check
          %p193 = pneg %p61
        $region34: #{tpu_custom_call.1} parent=27 // pred_check_branch
          %195 = sbr.rel (%p193) target = $region36
        $region35: #{tpu_custom_call.1} parent=27 // pred_region
          %s196 = smul.u32 8, %s15
          %p197 = scmp.lt.s32.totalorder %s196, 15
          %s198 = scalar_select %p197, %s196, 15
          %s199 = smul.addr %s198, 8
          %s200 = scalar_lea.vmem %s1, %s199
          %s201 = smul.u32 8, %s15
        $region36: #{tpu_custom_call.1} parent=27 // pred_fallthru
          _
      $region28: #{tpu_custom_call.1} parent=5 // pred_fallthru
        _
      %p202 = scmp.le.s32.totalorder 1, %s15
      %p203 = scmp.lt.s32.totalorder %s15, 3
      %p204 = pnand %p202, %p203
      %p205 = pneg %p204
      // Predicated region
      $region37: #{tpu_custom_call.1} parent=5 // pred_check
        _
      $region38: #{tpu_custom_call.1} parent=5 // pred_check_branch
        %207 = sbr.rel (%p204) target = $region40
      $region39: #{tpu_custom_call.1} parent=5 // pred_region
        %s208 = ssub.s32 %s15, 1
        %s209 = smul.u32 8, %s20
        %p210 = scmp.lt.s32.totalorder %s209, 15
        %s211 = scalar_select %p210, %s209, 15
        %s212 = smul.addr %s211, 8
        %s213 = scalar_lea.vmem %s0, %s212
        %p214 = pneg %p41
        %p215 = pneg %p38
        %s216 = smul.u32 8, %s20
        %p217 = scmp.lt.s32.totalorder %s216, 15
        %s218 = scalar_select %p217, %s216, 15
        %s219 = smul.addr %s218, 8
        %s220 = scalar_lea.vmem %s1, %s219
        %p221 = pneg %p67
        %p222 = pneg %p64
        %p223 = pneg %p88
        %p224 = pneg %p85
        %p225 = pneg %p109
        %p226 = pneg %p106
        %p227 = pneg %p130
        %p228 = pneg %p127
        %p229 = pneg %p156
        %p230 = pneg %p153
        %s231 = sand.u32 %s143, 1
        %s232 = scalar_lea.sflag [#allocation4], %s231
        %s233 = sand.u32 %s143, 1
        %s234 = smul.addr %s233, 64
        %s235 = scalar_lea.vmem [#allocation3], %s234
        %s236 = smul.u32 8, %s20
        %p237 = scmp.lt.s32.totalorder %s236, 15
        %s238 = scalar_select %p237, %s236, 15
        %s239 = smul.addr %s238, 8
        %s240 = scalar_lea.vmem %s0, %s239
        %s241 = smul.u32 8, %s20
        %s242 = smul.u32 8, %s20
        %p243 = scmp.lt.s32.totalorder %s242, 15
        %s244 = scalar_select %p243, %s242, 15
        %s245 = smul.addr %s244, 8
        %s246 = scalar_lea.vmem %s1, %s245
        %s247 = smul.u32 8, %s20
        %s248 = smul.u32 8, %s20
        %v249 = vld [vmem:[%s240] sm:$0xff]
        %v250 = vld [vmem:[%s240 + $0x8] sm:$0xff]
        %v251 = vld [vmem:[%s240 + $0x10] sm:$0xff]
        %v252 = vld [vmem:[%s240 + $0x18] sm:$0xff]
        %v253 = vld [vmem:[%s240 + $0x20] sm:$0xff]
        %v254 = vld [vmem:[%s240 + $0x28] sm:$0xff]
        %v255 = vld [vmem:[%s240 + $0x30] sm:$0xff]
        %v256 = vld [vmem:[%s240 + $0x38] sm:$0xff]
        %v257 = vlaneseq
        %v258 = vand.u32 %v257, 127
        %v259 = vld [vmem:[%s246] sm:$0xff]
        %v260 = vld [vmem:[%s246 + $0x8] sm:$0xff]
        %v261 = vld [vmem:[%s246 + $0x10] sm:$0xff]
        %v262 = vld [vmem:[%s246 + $0x18] sm:$0xff]
        %v263 = vld [vmem:[%s246 + $0x20] sm:$0xff]
        %v264 = vld [vmem:[%s246 + $0x28] sm:$0xff]
        %v265 = vld [vmem:[%s246 + $0x30] sm:$0xff]
        %v266 = vld [vmem:[%s246 + $0x38] sm:$0xff]
        %267 = vset.pattern.permute.xlu0 0
        %268 = vperm.xlu0 %267, %v259
        %v269 = vpop.permute.xlu0 %268
        %270 = vset.pattern.permute.xlu0 0
        %271 = vperm.xlu0 %270, %v260
        %v272 = vpop.permute.xlu0 %271
        %273 = vset.pattern.permute.xlu0 0
        %274 = vperm.xlu0 %273, %v261
        %v275 = vpop.permute.xlu0 %274
        %276 = vset.pattern.permute.xlu0 0
        %277 = vperm.xlu0 %276, %v262
        %v278 = vpop.permute.xlu0 %277
        %279 = vset.pattern.permute.xlu0 0
        %280 = vperm.xlu0 %279, %v263
        %v281 = vpop.permute.xlu0 %280
        %282 = vset.pattern.permute.xlu0 0
        %283 = vperm.xlu0 %282, %v264
        %v284 = vpop.permute.xlu0 %283
        %285 = vset.pattern.permute.xlu0 0
        %286 = vperm.xlu0 %285, %v265
        %v287 = vpop.permute.xlu0 %286
        %288 = vset.pattern.permute.xlu0 0
        %289 = vperm.xlu0 %288, %v266
        %v290 = vpop.permute.xlu0 %289
        %vm291 = vcmp.eq.s32.totalorder %v269, %v258
        %vm292 = vcmp.eq.s32.totalorder %v272, %v258
        %vm293 = vcmp.eq.s32.totalorder %v275, %v258
        %vm294 = vcmp.eq.s32.totalorder %v278, %v258
        %vm295 = vcmp.eq.s32.totalorder %v281, %v258
        %vm296 = vcmp.eq.s32.totalorder %v284, %v258
        %vm297 = vcmp.eq.s32.totalorder %v287, %v258
        %vm298 = vcmp.eq.s32.totalorder %v290, %v258
        %v299 = vsel %vm291, 1, 0
        %v300 = vsel %vm292, 1, 0
        %v301 = vsel %vm293, 1, 0
        %v302 = vsel %vm294, 1, 0
        %v303 = vsel %vm295, 1, 0
        %v304 = vsel %vm296, 1, 0
        %v305 = vsel %vm297, 1, 0
        %v306 = vsel %vm298, 1, 0
        %307 = vset.pattern.permute.xlu0 1
        %308 = vperm.xlu0 %307, %v259
        %v309 = vpop.permute.xlu0 %308
        %310 = vset.pattern.permute.xlu0 1
        %311 = vperm.xlu0 %310, %v260
        %v312 = vpop.permute.xlu0 %311
        %313 = vset.pattern.permute.xlu0 1
        %314 = vperm.xlu0 %313, %v261
        %v315 = vpop.permute.xlu0 %314
        %316 = vset.pattern.permute.xlu0 1
        %317 = vperm.xlu0 %316, %v262
        %v318 = vpop.permute.xlu0 %317
        %319 = vset.pattern.permute.xlu0 1
        %320 = vperm.xlu0 %319, %v263
        %v321 = vpop.permute.xlu0 %320
        %322 = vset.pattern.permute.xlu0 1
        %323 = vperm.xlu0 %322, %v264
        %v324 = vpop.permute.xlu0 %323
        %325 = vset.pattern.permute.xlu0 1
        %326 = vperm.xlu0 %325, %v265
        %v327 = vpop.permute.xlu0 %326
        %328 = vset.pattern.permute.xlu0 1
        %329 = vperm.xlu0 %328, %v266
        %v330 = vpop.permute.xlu0 %329
        %vm331 = vcmp.eq.s32.totalorder %v309, %v258
        %vm332 = vcmp.eq.s32.totalorder %v312, %v258
        %vm333 = vcmp.eq.s32.totalorder %v315, %v258
        %vm334 = vcmp.eq.s32.totalorder %v318, %v258
        %vm335 = vcmp.eq.s32.totalorder %v321, %v258
        %vm336 = vcmp.eq.s32.totalorder %v324, %v258
        %vm337 = vcmp.eq.s32.totalorder %v327, %v258
        %vm338 = vcmp.eq.s32.totalorder %v330, %v258
        %v339 = vsel %vm331, 1, 0
        %v340 = vsel %vm332, 1, 0
        %v341 = vsel %vm333, 1, 0
        %v342 = vsel %vm334, 1, 0
        %v343 = vsel %vm335, 1, 0
        %v344 = vsel %vm336, 1, 0
        %v345 = vsel %vm337, 1, 0
        %v346 = vsel %vm338, 1, 0
        %v347 = vadd.s32 %v299, %v339
        %v348 = vadd.s32 %v300, %v340
        %v349 = vadd.s32 %v301, %v341
        %v350 = vadd.s32 %v302, %v342
        %v351 = vadd.s32 %v303, %v343
        %v352 = vadd.s32 %v304, %v344
        %v353 = vadd.s32 %v305, %v345
        %v354 = vadd.s32 %v306, %v346
        %355 = vset.pattern.permute.xlu0 2
        %356 = vperm.xlu0 %355, %v259
        %v357 = vpop.permute.xlu0 %356
        %358 = vset.pattern.permute.xlu0 2
        %359 = vperm.xlu0 %358, %v260
        %v360 = vpop.permute.xlu0 %359
        %361 = vset.pattern.permute.xlu0 2
        %362 = vperm.xlu0 %361, %v261
        %v363 = vpop.permute.xlu0 %362
        %364 = vset.pattern.permute.xlu0 2
        %365 = vperm.xlu0 %364, %v262
        %v366 = vpop.permute.xlu0 %365
        %367 = vset.pattern.permute.xlu0 2
        %368 = vperm.xlu0 %367, %v263
        %v369 = vpop.permute.xlu0 %368
        %370 = vset.pattern.permute.xlu0 2
        %371 = vperm.xlu0 %370, %v264
        %v372 = vpop.permute.xlu0 %371
        %373 = vset.pattern.permute.xlu0 2
        %374 = vperm.xlu0 %373, %v265
        %v375 = vpop.permute.xlu0 %374
        %376 = vset.pattern.permute.xlu0 2
        %377 = vperm.xlu0 %376, %v266
        %v378 = vpop.permute.xlu0 %377
        %vm379 = vcmp.eq.s32.totalorder %v357, %v258
        %vm380 = vcmp.eq.s32.totalorder %v360, %v258
        %vm381 = vcmp.eq.s32.totalorder %v363, %v258
        %vm382 = vcmp.eq.s32.totalorder %v366, %v258
        %vm383 = vcmp.eq.s32.totalorder %v369, %v258
        %vm384 = vcmp.eq.s32.totalorder %v372, %v258
        %vm385 = vcmp.eq.s32.totalorder %v375, %v258
        %vm386 = vcmp.eq.s32.totalorder %v378, %v258
        %v387 = vsel %vm379, 1, 0
        %v388 = vsel %vm380, 1, 0
        %v389 = vsel %vm381, 1, 0
        %v390 = vsel %vm382, 1, 0
        %v391 = vsel %vm383, 1, 0
        %v392 = vsel %vm384, 1, 0
        %v393 = vsel %vm385, 1, 0
        %v394 = vsel %vm386, 1, 0
        %v395 = vadd.s32 %v347, %v387
        %v396 = vadd.s32 %v348, %v388
        %v397 = vadd.s32 %v349, %v389
        %v398 = vadd.s32 %v350, %v390
        %v399 = vadd.s32 %v351, %v391
        %v400 = vadd.s32 %v352, %v392
        %v401 = vadd.s32 %v353, %v393
        %v402 = vadd.s32 %v354, %v394
        %403 = vset.pattern.permute.xlu0 3
        %404 = vperm.xlu0 %403, %v259
        %v405 = vpop.permute.xlu0 %404
        %406 = vset.pattern.permute.xlu0 3
        %407 = vperm.xlu0 %406, %v260
        %v408 = vpop.permute.xlu0 %407
        %409 = vset.pattern.permute.xlu0 3
        %410 = vperm.xlu0 %409, %v261
        %v411 = vpop.permute.xlu0 %410
        %412 = vset.pattern.permute.xlu0 3
        %413 = vperm.xlu0 %412, %v262
        %v414 = vpop.permute.xlu0 %413
        %415 = vset.pattern.permute.xlu0 3
        %416 = vperm.xlu0 %415, %v263
        %v417 = vpop.permute.xlu0 %416
        %418 = vset.pattern.permute.xlu0 3
        %419 = vperm.xlu0 %418, %v264
        %v420 = vpop.permute.xlu0 %419
        %421 = vset.pattern.permute.xlu0 3
        %422 = vperm.xlu0 %421, %v265
        %v423 = vpop.permute.xlu0 %422
        %424 = vset.pattern.permute.xlu0 3
        %425 = vperm.xlu0 %424, %v266
        %v426 = vpop.permute.xlu0 %425
        %vm427 = vcmp.eq.s32.totalorder %v405, %v258
        %vm428 = vcmp.eq.s32.totalorder %v408, %v258
        %vm429 = vcmp.eq.s32.totalorder %v411, %v258
        %vm430 = vcmp.eq.s32.totalorder %v414, %v258
        %vm431 = vcmp.eq.s32.totalorder %v417, %v258
        %vm432 = vcmp.eq.s32.totalorder %v420, %v258
        %vm433 = vcmp.eq.s32.totalorder %v423, %v258
        %vm434 = vcmp.eq.s32.totalorder %v426, %v258
        %v435 = vsel %vm427, 1, 0
        %v436 = vsel %vm428, 1, 0
        %v437 = vsel %vm429, 1, 0
        %v438 = vsel %vm430, 1, 0
        %v439 = vsel %vm431, 1, 0
        %v440 = vsel %vm432, 1, 0
        %v441 = vsel %vm433, 1, 0
        %v442 = vsel %vm434, 1, 0
        %v443 = vadd.s32 %v395, %v435
        %v444 = vadd.s32 %v396, %v436
        %v445 = vadd.s32 %v397, %v437
        %v446 = vadd.s32 %v398, %v438
        %v447 = vadd.s32 %v399, %v439
        %v448 = vadd.s32 %v400, %v440
        %v449 = vadd.s32 %v401, %v441
        %v450 = vadd.s32 %v402, %v442
        %451 = vset.pattern.permute.xlu0 4
        %452 = vperm.xlu0 %451, %v259
        %v453 = vpop.permute.xlu0 %452
        %454 = vset.pattern.permute.xlu0 4
        %455 = vperm.xlu0 %454, %v260
        %v456 = vpop.permute.xlu0 %455
        %457 = vset.pattern.permute.xlu0 4
        %458 = vperm.xlu0 %457, %v261
        %v459 = vpop.permute.xlu0 %458
        %460 = vset.pattern.permute.xlu0 4
        %461 = vperm.xlu0 %460, %v262
        %v462 = vpop.permute.xlu0 %461
        %463 = vset.pattern.permute.xlu0 4
        %464 = vperm.xlu0 %463, %v263
        %v465 = vpop.permute.xlu0 %464
        %466 = vset.pattern.permute.xlu0 4
        %467 = vperm.xlu0 %466, %v264
        %v468 = vpop.permute.xlu0 %467
        %469 = vset.pattern.permute.xlu0 4
        %470 = vperm.xlu0 %469, %v265
        %v471 = vpop.permute.xlu0 %470
        %472 = vset.pattern.permute.xlu0 4
        %473 = vperm.xlu0 %472, %v266
        %v474 = vpop.permute.xlu0 %473
        %vm475 = vcmp.eq.s32.totalorder %v453, %v258
        %vm476 = vcmp.eq.s32.totalorder %v456, %v258
        %vm477 = vcmp.eq.s32.totalorder %v459, %v258
        %vm478 = vcmp.eq.s32.totalorder %v462, %v258
        %vm479 = vcmp.eq.s32.totalorder %v465, %v258
        %vm480 = vcmp.eq.s32.totalorder %v468, %v258
        %vm481 = vcmp.eq.s32.totalorder %v471, %v258
        %vm482 = vcmp.eq.s32.totalorder %v474, %v258
        %v483 = vsel %vm475, 1, 0
        %v484 = vsel %vm476, 1, 0
        %v485 = vsel %vm477, 1, 0
        %v486 = vsel %vm478, 1, 0
        %v487 = vsel %vm479, 1, 0
        %v488 = vsel %vm480, 1, 0
        %v489 = vsel %vm481, 1, 0
        %v490 = vsel %vm482, 1, 0
        %v491 = vadd.s32 %v443, %v483
        %v492 = vadd.s32 %v444, %v484
        %v493 = vadd.s32 %v445, %v485
        %v494 = vadd.s32 %v446, %v486
        %v495 = vadd.s32 %v447, %v487
        %v496 = vadd.s32 %v448, %v488
        %v497 = vadd.s32 %v449, %v489
        %v498 = vadd.s32 %v450, %v490
        %499 = vset.pattern.permute.xlu0 5
        %500 = vperm.xlu0 %499, %v259
        %v501 = vpop.permute.xlu0 %500
        %502 = vset.pattern.permute.xlu0 5
        %503 = vperm.xlu0 %502, %v260
        %v504 = vpop.permute.xlu0 %503
        %505 = vset.pattern.permute.xlu0 5
        %506 = vperm.xlu0 %505, %v261
        %v507 = vpop.permute.xlu0 %506
        %508 = vset.pattern.permute.xlu0 5
        %509 = vperm.xlu0 %508, %v262
        %v510 = vpop.permute.xlu0 %509
        %511 = vset.pattern.permute.xlu0 5
        %512 = vperm.xlu0 %511, %v263
        %v513 = vpop.permute.xlu0 %512
        %514 = vset.pattern.permute.xlu0 5
        %515 = vperm.xlu0 %514, %v264
        %v516 = vpop.permute.xlu0 %515
        %517 = vset.pattern.permute.xlu0 5
        %518 = vperm.xlu0 %517, %v265
        %v519 = vpop.permute.xlu0 %518
        %520 = vset.pattern.permute.xlu0 5
        %521 = vperm.xlu0 %520, %v266
        %v522 = vpop.permute.xlu0 %521
        %vm523 = vcmp.eq.s32.totalorder %v501, %v258
        %vm524 = vcmp.eq.s32.totalorder %v504, %v258
        %vm525 = vcmp.eq.s32.totalorder %v507, %v258
        %vm526 = vcmp.eq.s32.totalorder %v510, %v258
        %vm527 = vcmp.eq.s32.totalorder %v513, %v258
        %vm528 = vcmp.eq.s32.totalorder %v516, %v258
        %vm529 = vcmp.eq.s32.totalorder %v519, %v258
        %vm530 = vcmp.eq.s32.totalorder %v522, %v258
        %v531 = vsel %vm523, 1, 0
        %v532 = vsel %vm524, 1, 0
        %v533 = vsel %vm525, 1, 0
        %v534 = vsel %vm526, 1, 0
        %v535 = vsel %vm527, 1, 0
        %v536 = vsel %vm528, 1, 0
        %v537 = vsel %vm529, 1, 0
        %v538 = vsel %vm530, 1, 0
        %v539 = vadd.s32 %v491, %v531
        %v540 = vadd.s32 %v492, %v532
        %v541 = vadd.s32 %v493, %v533
        %v542 = vadd.s32 %v494, %v534
        %v543 = vadd.s32 %v495, %v535
        %v544 = vadd.s32 %v496, %v536
        %v545 = vadd.s32 %v497, %v537
        %v546 = vadd.s32 %v498, %v538
        %547 = vset.pattern.permute.xlu0 6
        %548 = vperm.xlu0 %547, %v259
        %v549 = vpop.permute.xlu0 %548
        %550 = vset.pattern.permute.xlu0 6
        %551 = vperm.xlu0 %550, %v260
        %v552 = vpop.permute.xlu0 %551
        %553 = vset.pattern.permute.xlu0 6
        %554 = vperm.xlu0 %553, %v261
        %v555 = vpop.permute.xlu0 %554
        %556 = vset.pattern.permute.xlu0 6
        %557 = vperm.xlu0 %556, %v262
        %v558 = vpop.permute.xlu0 %557
        %559 = vset.pattern.permute.xlu0 6
        %560 = vperm.xlu0 %559, %v263
        %v561 = vpop.permute.xlu0 %560
        %562 = vset.pattern.permute.xlu0 6
        %563 = vperm.xlu0 %562, %v264
        %v564 = vpop.permute.xlu0 %563
        %565 = vset.pattern.permute.xlu0 6
        %566 = vperm.xlu0 %565, %v265
        %v567 = vpop.permute.xlu0 %566
        %568 = vset.pattern.permute.xlu0 6
        %569 = vperm.xlu0 %568, %v266
        %v570 = vpop.permute.xlu0 %569
        %vm571 = vcmp.eq.s32.totalorder %v549, %v258
        %vm572 = vcmp.eq.s32.totalorder %v552, %v258
        %vm573 = vcmp.eq.s32.totalorder %v555, %v258
        %vm574 = vcmp.eq.s32.totalorder %v558, %v258
        %vm575 = vcmp.eq.s32.totalorder %v561, %v258
        %vm576 = vcmp.eq.s32.totalorder %v564, %v258
        %vm577 = vcmp.eq.s32.totalorder %v567, %v258
        %vm578 = vcmp.eq.s32.totalorder %v570, %v258
        %v579 = vsel %vm571, 1, 0
        %v580 = vsel %vm572, 1, 0
        %v581 = vsel %vm573, 1, 0
        %v582 = vsel %vm574, 1, 0
        %v583 = vsel %vm575, 1, 0
        %v584 = vsel %vm576, 1, 0
        %v585 = vsel %vm577, 1, 0
        %v586 = vsel %vm578, 1, 0
        %v587 = vadd.s32 %v539, %v579
        %v588 = vadd.s32 %v540, %v580
        %v589 = vadd.s32 %v541, %v581
        %v590 = vadd.s32 %v542, %v582
        %v591 = vadd.s32 %v543, %v583
        %v592 = vadd.s32 %v544, %v584
        %v593 = vadd.s32 %v545, %v585
        %v594 = vadd.s32 %v546, %v586
        %595 = vset.pattern.permute.xlu0 7
        %596 = vperm.xlu0 %595, %v259
        %v597 = vpop.permute.xlu0 %596
        %598 = vset.pattern.permute.xlu0 7
        %599 = vperm.xlu0 %598, %v260
        %v600 = vpop.permute.xlu0 %599
        %601 = vset.pattern.permute.xlu0 7
        %602 = vperm.xlu0 %601, %v261
        %v603 = vpop.permute.xlu0 %602
        %604 = vset.pattern.permute.xlu0 7
        %605 = vperm.xlu0 %604, %v262
        %v606 = vpop.permute.xlu0 %605
        %607 = vset.pattern.permute.xlu0 7
        %608 = vperm.xlu0 %607, %v263
        %v609 = vpop.permute.xlu0 %608
        %610 = vset.pattern.permute.xlu0 7
        %611 = vperm.xlu0 %610, %v264
        %v612 = vpop.permute.xlu0 %611
        %613 = vset.pattern.permute.xlu0 7
        %614 = vperm.xlu0 %613, %v265
        %v615 = vpop.permute.xlu0 %614
        %616 = vset.pattern.permute.xlu0 7
        %617 = vperm.xlu0 %616, %v266
        %v618 = vpop.permute.xlu0 %617
        %vm619 = vcmp.eq.s32.totalorder %v597, %v258
        %vm620 = vcmp.eq.s32.totalorder %v600, %v258
        %vm621 = vcmp.eq.s32.totalorder %v603, %v258
        %vm622 = vcmp.eq.s32.totalorder %v606, %v258
        %vm623 = vcmp.eq.s32.totalorder %v609, %v258
        %vm624 = vcmp.eq.s32.totalorder %v612, %v258
        %vm625 = vcmp.eq.s32.totalorder %v615, %v258
        %vm626 = vcmp.eq.s32.totalorder %v618, %v258
        %v627 = vsel %vm619, 1, 0
        %v628 = vsel %vm620, 1, 0
        %v629 = vsel %vm621, 1, 0
        %v630 = vsel %vm622, 1, 0
        %v631 = vsel %vm623, 1, 0
        %v632 = vsel %vm624, 1, 0
        %v633 = vsel %vm625, 1, 0
        %v634 = vsel %vm626, 1, 0
        %v635 = vadd.s32 %v587, %v627
        %v636 = vadd.s32 %v588, %v628
        %v637 = vadd.s32 %v589, %v629
        %v638 = vadd.s32 %v590, %v630
        %v639 = vadd.s32 %v591, %v631
        %v640 = vadd.s32 %v592, %v632
        %v641 = vadd.s32 %v593, %v633
        %v642 = vadd.s32 %v594, %v634
        %v643 = vcvt.s32.f32 %v635
        %v644 = vcvt.s32.f32 %v636
        %v645 = vcvt.s32.f32 %v637
        %v646 = vcvt.s32.f32 %v638
        %v647 = vcvt.s32.f32 %v639
        %v648 = vcvt.s32.f32 %v640
        %v649 = vcvt.s32.f32 %v641
        %v650 = vcvt.s32.f32 %v642
        %s651 = sld [smem:[#allocation2]]
        %s652 = sadd.f32 %s651, 1.0
        %v653 = vstv %s652
        %v654 = vmul.f32 %v653, %v249
        %v655 = vmul.f32 %v653, %v250
        %v656 = vmul.f32 %v653, %v251
        %v657 = vmul.f32 %v653, %v252
        %v658 = vmul.f32 %v653, %v253
        %v659 = vmul.f32 %v653, %v254
        %v660 = vmul.f32 %v653, %v255
        %v661 = vmul.f32 %v653, %v256
        %vm662 = vcmask 523264
        %v664 = vsel %vm662, %v643, 0
        %v667 = vsel %vm662, %v644, 0
        %v670 = vsel %vm662, %v645, 0
        %v673 = vsel %vm662, %v646, 0
        %v676 = vsel %vm662, %v647, 0
        %v679 = vsel %vm662, %v648, 0
        %v682 = vsel %vm662, %v649, 0
        %v685 = vsel %vm662, %v650, 0
        %687 = vmatpush.msra.mxu0 0.0
        %688 = vmatpush.msra.mxu0 0.0
        %689 = vmatpush.msra.mxu0 0.0
        %690 = vmatpush.msra.mxu0 0.0
        %691 = vmatpush.msra.mxu0 0.0
        %692 = vmatpush.msra.mxu0 0.0
        %693 = vmatpush.msra.mxu0 0.0
        %694 = vmatpush.msra.mxu0 0.0
        %v695 = vand.u32 %v256, 4294901760
        %696 = vmatpush.msra.mxu0 %v695
        %v697 = vand.u32 %v255, 4294901760
        %698 = vmatpush.msra.mxu0 %v697
        %v699 = vand.u32 %v254, 4294901760
        %700 = vmatpush.msra.mxu0 %v699
        %v701 = vand.u32 %v253, 4294901760
        %702 = vmatpush.msra.mxu0 %v701
        %v703 = vand.u32 %v252, 4294901760
        %704 = vmatpush.msra.mxu0 %v703
        %v705 = vand.u32 %v251, 4294901760
        %706 = vmatpush.msra.mxu0 %v705
        %v707 = vand.u32 %v250, 4294901760
        %708 = vmatpush.msra.mxu0 %v707
        %v709 = vand.u32 %v249, 4294901760
        %710 = vmatpush.msra.mxu0 %v709
        %v711 = vand.u32 %v664, 4294901760
        %v712 = vsub.f32 %v664, %v711
        %v713 = vand.u32 %v712, 4294901760
        %v714 = vsub.f32 %v712, %v713
        %v715 = vand.u32 %v714, 4294901760
        %716 = vmatmul.f32.gmra.mxu0 %v715
        %v717 = vpop.f32.mrf.mxu0
        %v718 = vadd.f32 %v654, %v717
        %v719 = vand.u32 %v667, 4294901760
        %v720 = vsub.f32 %v667, %v719
        %v721 = vand.u32 %v720, 4294901760
        %v722 = vsub.f32 %v720, %v721
        %v723 = vand.u32 %v722, 4294901760
        %724 = vmatmul.f32.gmra.mxu0 %v723
        %v725 = vpop.f32.mrf.mxu0
        %v726 = vadd.f32 %v655, %v725
        %v727 = vand.u32 %v670, 4294901760
        %v728 = vsub.f32 %v670, %v727
        %v729 = vand.u32 %v728, 4294901760
        %v730 = vsub.f32 %v728, %v729
        %v731 = vand.u32 %v730, 4294901760
        %732 = vmatmul.f32.gmra.mxu0 %v731
        %v733 = vpop.f32.mrf.mxu0
        %v734 = vadd.f32 %v656, %v733
        %v735 = vand.u32 %v673, 4294901760
        %v736 = vsub.f32 %v673, %v735
        %v737 = vand.u32 %v736, 4294901760
        %v738 = vsub.f32 %v736, %v737
        %v739 = vand.u32 %v738, 4294901760
        %740 = vmatmul.f32.gmra.mxu0 %v739
        %v741 = vpop.f32.mrf.mxu0
        %v742 = vadd.f32 %v657, %v741
        %v743 = vand.u32 %v676, 4294901760
        %v744 = vsub.f32 %v676, %v743
        %v745 = vand.u32 %v744, 4294901760
        %v746 = vsub.f32 %v744, %v745
        %v747 = vand.u32 %v746, 4294901760
        %748 = vmatmul.f32.gmra.mxu0 %v747
        %v749 = vpop.f32.mrf.mxu0
        %v750 = vadd.f32 %v658, %v749
        %v751 = vand.u32 %v679, 4294901760
        %v752 = vsub.f32 %v679, %v751
        %v753 = vand.u32 %v752, 4294901760
        %v754 = vsub.f32 %v752, %v753
        %v755 = vand.u32 %v754, 4294901760
        %756 = vmatmul.f32.gmra.mxu0 %v755
        %v757 = vpop.f32.mrf.mxu0
        %v758 = vadd.f32 %v659, %v757
        %v759 = vand.u32 %v682, 4294901760
        %v760 = vsub.f32 %v682, %v759
        %v761 = vand.u32 %v760, 4294901760
        %v762 = vsub.f32 %v760, %v761
        %v763 = vand.u32 %v762, 4294901760
        %764 = vmatmul.f32.gmra.mxu0 %v763
        %v765 = vpop.f32.mrf.mxu0
        %v766 = vadd.f32 %v660, %v765
        %v767 = vand.u32 %v685, 4294901760
        %v768 = vsub.f32 %v685, %v767
        %v769 = vand.u32 %v768, 4294901760
        %v770 = vsub.f32 %v768, %v769
        %v771 = vand.u32 %v770, 4294901760
        %772 = vmatmul.f32.gmra.mxu0 %v771
        %v773 = vpop.f32.mrf.mxu0
        %v774 = vadd.f32 %v661, %v773
        %775 = vdwg.mxu0
        %776 = vmatpush.msra.mxu0 0.0
        %777 = vmatpush.msra.mxu0 0.0
        %778 = vmatpush.msra.mxu0 0.0
        %779 = vmatpush.msra.mxu0 0.0
        %780 = vmatpush.msra.mxu0 0.0
        %781 = vmatpush.msra.mxu0 0.0
        %782 = vmatpush.msra.mxu0 0.0
        %783 = vmatpush.msra.mxu0 0.0
        %v784 = vand.u32 %v256, 4294901760
        %v785 = vsub.f32 %v256, %v784
        %v786 = vand.u32 %v785, 4294901760
        %v787 = vsub.f32 %v785, %v786
        %v788 = vand.u32 %v787, 4294901760
        %789 = vmatpush.msra.mxu0 %v788
        %v790 = vand.u32 %v255, 4294901760
        %v791 = vsub.f32 %v255, %v790
        %v792 = vand.u32 %v791, 4294901760
        %v793 = vsub.f32 %v791, %v792
        %v794 = vand.u32 %v793, 4294901760
        %795 = vmatpush.msra.mxu0 %v794
        %v796 = vand.u32 %v254, 4294901760
        %v797 = vsub.f32 %v254, %v796
        %v798 = vand.u32 %v797, 4294901760
        %v799 = vsub.f32 %v797, %v798
        %v800 = vand.u32 %v799, 4294901760
        %801 = vmatpush.msra.mxu0 %v800
        %v802 = vand.u32 %v253, 4294901760
        %v803 = vsub.f32 %v253, %v802
        %v804 = vand.u32 %v803, 4294901760
        %v805 = vsub.f32 %v803, %v804
        %v806 = vand.u32 %v805, 4294901760
        %807 = vmatpush.msra.mxu0 %v806
        %v808 = vand.u32 %v252, 4294901760
        %v809 = vsub.f32 %v252, %v808
        %v810 = vand.u32 %v809, 4294901760
        %v811 = vsub.f32 %v809, %v810
        %v812 = vand.u32 %v811, 4294901760
        %813 = vmatpush.msra.mxu0 %v812
        %v814 = vand.u32 %v251, 4294901760
        %v815 = vsub.f32 %v251, %v814
        %v816 = vand.u32 %v815, 4294901760
        %v817 = vsub.f32 %v815, %v816
        %v818 = vand.u32 %v817, 4294901760
        %819 = vmatpush.msra.mxu0 %v818
        %v820 = vand.u32 %v250, 4294901760
        %v821 = vsub.f32 %v250, %v820
        %v822 = vand.u32 %v821, 4294901760
        %v823 = vsub.f32 %v821, %v822
        %v824 = vand.u32 %v823, 4294901760
        %825 = vmatpush.msra.mxu0 %v824
        %v826 = vand.u32 %v249, 4294901760
        %v827 = vsub.f32 %v249, %v826
        %v828 = vand.u32 %v827, 4294901760
        %v829 = vsub.f32 %v827, %v828
        %v830 = vand.u32 %v829, 4294901760
        %831 = vmatpush.msra.mxu0 %v830
        %v832 = vand.u32 %v664, 4294901760
        %833 = vmatmul.f32.gmra.mxu0 %v832
        %v834 = vpop.f32.mrf.mxu0
        %v835 = vadd.f32 %v718, %v834
        %v836 = vand.u32 %v667, 4294901760
        %837 = vmatmul.f32.gmra.mxu0 %v836
        %v838 = vpop.f32.mrf.mxu0
        %v839 = vadd.f32 %v726, %v838
        %v840 = vand.u32 %v670, 4294901760
        %841 = vmatmul.f32.gmra.mxu0 %v840
        %v842 = vpop.f32.mrf.mxu0
        %v843 = vadd.f32 %v734, %v842
        %v844 = vand.u32 %v673, 4294901760
        %845 = vmatmul.f32.gmra.mxu0 %v844
        %v846 = vpop.f32.mrf.mxu0
        %v847 = vadd.f32 %v742, %v846
        %v848 = vand.u32 %v676, 4294901760
        %849 = vmatmul.f32.gmra.mxu0 %v848
        %v850 = vpop.f32.mrf.mxu0
        %v851 = vadd.f32 %v750, %v850
        %v852 = vand.u32 %v679, 4294901760
        %853 = vmatmul.f32.gmra.mxu0 %v852
        %v854 = vpop.f32.mrf.mxu0
        %v855 = vadd.f32 %v758, %v854
        %v856 = vand.u32 %v682, 4294901760
        %857 = vmatmul.f32.gmra.mxu0 %v856
        %v858 = vpop.f32.mrf.mxu0
        %v859 = vadd.f32 %v766, %v858
        %v860 = vand.u32 %v685, 4294901760
        %861 = vmatmul.f32.gmra.mxu0 %v860
        %v862 = vpop.f32.mrf.mxu0
        %v863 = vadd.f32 %v774, %v862
        %864 = vdwg.mxu0
        %865 = vmatpush.msra.mxu0 0.0
        %866 = vmatpush.msra.mxu0 0.0
        %867 = vmatpush.msra.mxu0 0.0
        %868 = vmatpush.msra.mxu0 0.0
        %869 = vmatpush.msra.mxu0 0.0
        %870 = vmatpush.msra.mxu0 0.0
        %871 = vmatpush.msra.mxu0 0.0
        %872 = vmatpush.msra.mxu0 0.0
        %v873 = vand.u32 %v256, 4294901760
        %v874 = vsub.f32 %v256, %v873
        %875 = vmatpush.msra.mxu0 %v874
        %v876 = vand.u32 %v255, 4294901760
        %v877 = vsub.f32 %v255, %v876
        %878 = vmatpush.msra.mxu0 %v877
        %v879 = vand.u32 %v254, 4294901760
        %v880 = vsub.f32 %v254, %v879
        %881 = vmatpush.msra.mxu0 %v880
        %v882 = vand.u32 %v253, 4294901760
        %v883 = vsub.f32 %v253, %v882
        %884 = vmatpush.msra.mxu0 %v883
        %v885 = vand.u32 %v252, 4294901760
        %v886 = vsub.f32 %v252, %v885
        %887 = vmatpush.msra.mxu0 %v886
        %v888 = vand.u32 %v251, 4294901760
        %v889 = vsub.f32 %v251, %v888
        %890 = vmatpush.msra.mxu0 %v889
        %v891 = vand.u32 %v250, 4294901760
        %v892 = vsub.f32 %v250, %v891
        %893 = vmatpush.msra.mxu0 %v892
        %v894 = vand.u32 %v249, 4294901760
        %v895 = vsub.f32 %v249, %v894
        %896 = vmatpush.msra.mxu0 %v895
        %v897 = vand.u32 %v664, 4294901760
        %v898 = vsub.f32 %v664, %v897
        %899 = vmatmul.f32.gmra.mxu0 %v898
        %v900 = vpop.f32.mrf.mxu0
        %v901 = vadd.f32 %v835, %v900
        %v902 = vand.u32 %v667, 4294901760
        %v903 = vsub.f32 %v667, %v902
        %904 = vmatmul.f32.gmra.mxu0 %v903
        %v905 = vpop.f32.mrf.mxu0
        %v906 = vadd.f32 %v839, %v905
        %v907 = vand.u32 %v670, 4294901760
        %v908 = vsub.f32 %v670, %v907
        %909 = vmatmul.f32.gmra.mxu0 %v908
        %v910 = vpop.f32.mrf.mxu0
        %v911 = vadd.f32 %v843, %v910
        %v912 = vand.u32 %v673, 4294901760
        %v913 = vsub.f32 %v673, %v912
        %914 = vmatmul.f32.gmra.mxu0 %v913
        %v915 = vpop.f32.mrf.mxu0
        %v916 = vadd.f32 %v847, %v915
        %v917 = vand.u32 %v676, 4294901760
        %v918 = vsub.f32 %v676, %v917
        %919 = vmatmul.f32.gmra.mxu0 %v918
        %v920 = vpop.f32.mrf.mxu0
        %v921 = vadd.f32 %v851, %v920
        %v922 = vand.u32 %v679, 4294901760
        %v923 = vsub.f32 %v679, %v922
        %924 = vmatmul.f32.gmra.mxu0 %v923
        %v925 = vpop.f32.mrf.mxu0
        %v926 = vadd.f32 %v855, %v925
        %v927 = vand.u32 %v682, 4294901760
        %v928 = vsub.f32 %v682, %v927
        %929 = vmatmul.f32.gmra.mxu0 %v928
        %v930 = vpop.f32.mrf.mxu0
        %v931 = vadd.f32 %v859, %v930
        %v932 = vand.u32 %v685, 4294901760
        %v933 = vsub.f32 %v685, %v932
        %934 = vmatmul.f32.gmra.mxu0 %v933
        %v935 = vpop.f32.mrf.mxu0
        %v936 = vadd.f32 %v863, %v935
        %937 = vdwg.mxu0
        %938 = vmatpush.msra.mxu0 0.0
        %939 = vmatpush.msra.mxu0 0.0
        %940 = vmatpush.msra.mxu0 0.0
        %941 = vmatpush.msra.mxu0 0.0
        %942 = vmatpush.msra.mxu0 0.0
        %943 = vmatpush.msra.mxu0 0.0
        %944 = vmatpush.msra.mxu0 0.0
        %945 = vmatpush.msra.mxu0 0.0
        %v946 = vand.u32 %v256, 4294901760
        %947 = vmatpush.msra.mxu0 %v946
        %v948 = vand.u32 %v255, 4294901760
        %949 = vmatpush.msra.mxu0 %v948
        %v950 = vand.u32 %v254, 4294901760
        %951 = vmatpush.msra.mxu0 %v950
        %v952 = vand.u32 %v253, 4294901760
        %953 = vmatpush.msra.mxu0 %v952
        %v954 = vand.u32 %v252, 4294901760
        %955 = vmatpush.msra.mxu0 %v954
        %v956 = vand.u32 %v251, 4294901760
        %957 = vmatpush.msra.mxu0 %v956
        %v958 = vand.u32 %v250, 4294901760
        %959 = vmatpush.msra.mxu0 %v958
        %v960 = vand.u32 %v249, 4294901760
        %961 = vmatpush.msra.mxu0 %v960
        %v962 = vand.u32 %v664, 4294901760
        %v963 = vsub.f32 %v664, %v962
        %v964 = vand.u32 %v963, 4294901760
        %965 = vmatmul.f32.gmra.mxu0 %v964
        %v966 = vpop.f32.mrf.mxu0
        %v967 = vadd.f32 %v901, %v966
        %v968 = vand.u32 %v667, 4294901760
        %v969 = vsub.f32 %v667, %v968
        %v970 = vand.u32 %v969, 4294901760
        %971 = vmatmul.f32.gmra.mxu0 %v970
        %v972 = vpop.f32.mrf.mxu0
        %v973 = vadd.f32 %v906, %v972
        %v974 = vand.u32 %v670, 4294901760
        %v975 = vsub.f32 %v670, %v974
        %v976 = vand.u32 %v975, 4294901760
        %977 = vmatmul.f32.gmra.mxu0 %v976
        %v978 = vpop.f32.mrf.mxu0
        %v979 = vadd.f32 %v911, %v978
        %v980 = vand.u32 %v673, 4294901760
        %v981 = vsub.f32 %v673, %v980
        %v982 = vand.u32 %v981, 4294901760
        %983 = vmatmul.f32.gmra.mxu0 %v982
        %v984 = vpop.f32.mrf.mxu0
        %v985 = vadd.f32 %v916, %v984
        %v986 = vand.u32 %v676, 4294901760
        %v987 = vsub.f32 %v676, %v986
        %v988 = vand.u32 %v987, 4294901760
        %989 = vmatmul.f32.gmra.mxu0 %v988
        %v990 = vpop.f32.mrf.mxu0
        %v991 = vadd.f32 %v921, %v990
        %v992 = vand.u32 %v679, 4294901760
        %v993 = vsub.f32 %v679, %v992
        %v994 = vand.u32 %v993, 4294901760
        %995 = vmatmul.f32.gmra.mxu0 %v994
        %v996 = vpop.f32.mrf.mxu0
        %v997 = vadd.f32 %v926, %v996
        %v998 = vand.u32 %v682, 4294901760
        %v999 = vsub.f32 %v682, %v998
        %v1000 = vand.u32 %v999, 4294901760
        %1001 = vmatmul.f32.gmra.mxu0 %v1000
        %v1002 = vpop.f32.mrf.mxu0
        %v1003 = vadd.f32 %v931, %v1002
        %v1004 = vand.u32 %v685, 4294901760
        %v1005 = vsub.f32 %v685, %v1004
        %v1006 = vand.u32 %v1005, 4294901760
        %1007 = vmatmul.f32.gmra.mxu0 %v1006
        %v1008 = vpop.f32.mrf.mxu0
        %v1009 = vadd.f32 %v936, %v1008
        %1010 = vdwg.mxu0
        %1011 = vmatpush.msra.mxu0 0.0
        %1012 = vmatpush.msra.mxu0 0.0
        %1013 = vmatpush.msra.mxu0 0.0
        %1014 = vmatpush.msra.mxu0 0.0
        %1015 = vmatpush.msra.mxu0 0.0
        %1016 = vmatpush.msra.mxu0 0.0
        %1017 = vmatpush.msra.mxu0 0.0
        %1018 = vmatpush.msra.mxu0 0.0
        %v1019 = vand.u32 %v256, 4294901760
        %v1020 = vsub.f32 %v256, %v1019
        %v1021 = vand.u32 %v1020, 4294901760
        %1022 = vmatpush.msra.mxu0 %v1021
        %v1023 = vand.u32 %v255, 4294901760
        %v1024 = vsub.f32 %v255, %v1023
        %v1025 = vand.u32 %v1024, 4294901760
        %1026 = vmatpush.msra.mxu0 %v1025
        %v1027 = vand.u32 %v254, 4294901760
        %v1028 = vsub.f32 %v254, %v1027
        %v1029 = vand.u32 %v1028, 4294901760
        %1030 = vmatpush.msra.mxu0 %v1029
        %v1031 = vand.u32 %v253, 4294901760
        %v1032 = vsub.f32 %v253, %v1031
        %v1033 = vand.u32 %v1032, 4294901760
        %1034 = vmatpush.msra.mxu0 %v1033
        %v1035 = vand.u32 %v252, 4294901760
        %v1036 = vsub.f32 %v252, %v1035
        %v1037 = vand.u32 %v1036, 4294901760
        %1038 = vmatpush.msra.mxu0 %v1037
        %v1039 = vand.u32 %v251, 4294901760
        %v1040 = vsub.f32 %v251, %v1039
        %v1041 = vand.u32 %v1040, 4294901760
        %1042 = vmatpush.msra.mxu0 %v1041
        %v1043 = vand.u32 %v250, 4294901760
        %v1044 = vsub.f32 %v250, %v1043
        %v1045 = vand.u32 %v1044, 4294901760
        %1046 = vmatpush.msra.mxu0 %v1045
        %v1047 = vand.u32 %v249, 4294901760
        %v1048 = vsub.f32 %v249, %v1047
        %v1049 = vand.u32 %v1048, 4294901760
        %1050 = vmatpush.msra.mxu0 %v1049
        %v1051 = vand.u32 %v664, 4294901760
        %1052 = vmatmul.f32.gmra.mxu0 %v1051
        %v1053 = vpop.f32.mrf.mxu0
        %v1054 = vadd.f32 %v967, %v1053
        %v1055 = vand.u32 %v667, 4294901760
        %1056 = vmatmul.f32.gmra.mxu0 %v1055
        %v1057 = vpop.f32.mrf.mxu0
        %v1058 = vadd.f32 %v973, %v1057
        %v1059 = vand.u32 %v670, 4294901760
        %1060 = vmatmul.f32.gmra.mxu0 %v1059
        %v1061 = vpop.f32.mrf.mxu0
        %v1062 = vadd.f32 %v979, %v1061
        %v1063 = vand.u32 %v673, 4294901760
        %1064 = vmatmul.f32.gmra.mxu0 %v1063
        %v1065 = vpop.f32.mrf.mxu0
        %v1066 = vadd.f32 %v985, %v1065
        %v1067 = vand.u32 %v676, 4294901760
        %1068 = vmatmul.f32.gmra.mxu0 %v1067
        %v1069 = vpop.f32.mrf.mxu0
        %v1070 = vadd.f32 %v991, %v1069
        %v1071 = vand.u32 %v679, 4294901760
        %1072 = vmatmul.f32.gmra.mxu0 %v1071
        %v1073 = vpop.f32.mrf.mxu0
        %v1074 = vadd.f32 %v997, %v1073
        %v1075 = vand.u32 %v682, 4294901760
        %1076 = vmatmul.f32.gmra.mxu0 %v1075
        %v1077 = vpop.f32.mrf.mxu0
        %v1078 = vadd.f32 %v1003, %v1077
        %v1079 = vand.u32 %v685, 4294901760
        %1080 = vmatmul.f32.gmra.mxu0 %v1079
        %v1081 = vpop.f32.mrf.mxu0
        %v1082 = vadd.f32 %v1009, %v1081
        %1083 = vdwg.mxu0
        %1084 = vmatpush.msra.mxu0 0.0
        %1085 = vmatpush.msra.mxu0 0.0
        %1086 = vmatpush.msra.mxu0 0.0
        %1087 = vmatpush.msra.mxu0 0.0
        %1088 = vmatpush.msra.mxu0 0.0
        %1089 = vmatpush.msra.mxu0 0.0
        %1090 = vmatpush.msra.mxu0 0.0
        %1091 = vmatpush.msra.mxu0 0.0
        %v1092 = vand.u32 %v256, 4294901760
        %1093 = vmatpush.msra.mxu0 %v1092
        %v1094 = vand.u32 %v255, 4294901760
        %1095 = vmatpush.msra.mxu0 %v1094
        %v1096 = vand.u32 %v254, 4294901760
        %1097 = vmatpush.msra.mxu0 %v1096
        %v1098 = vand.u32 %v253, 4294901760
        %1099 = vmatpush.msra.mxu0 %v1098
        %v1100 = vand.u32 %v252, 4294901760
        %1101 = vmatpush.msra.mxu0 %v1100
        %v1102 = vand.u32 %v251, 4294901760
        %1103 = vmatpush.msra.mxu0 %v1102
        %v1104 = vand.u32 %v250, 4294901760
        %1105 = vmatpush.msra.mxu0 %v1104
        %v1106 = vand.u32 %v249, 4294901760
        %1107 = vmatpush.msra.mxu0 %v1106
        %v1108 = vand.u32 %v664, 4294901760
        %1109 = vmatmul.f32.gmra.mxu0 %v1108
        %v1110 = vpop.f32.mrf.mxu0
        %v1111 = vadd.f32 %v1054, %v1110
        %v1112 = vand.u32 %v667, 4294901760
        %1113 = vmatmul.f32.gmra.mxu0 %v1112
        %v1114 = vpop.f32.mrf.mxu0
        %v1115 = vadd.f32 %v1058, %v1114
        %v1116 = vand.u32 %v670, 4294901760
        %1117 = vmatmul.f32.gmra.mxu0 %v1116
        %v1118 = vpop.f32.mrf.mxu0
        %v1119 = vadd.f32 %v1062, %v1118
        %v1120 = vand.u32 %v673, 4294901760
        %1121 = vmatmul.f32.gmra.mxu0 %v1120
        %v1122 = vpop.f32.mrf.mxu0
        %v1123 = vadd.f32 %v1066, %v1122
        %v1124 = vand.u32 %v676, 4294901760
        %1125 = vmatmul.f32.gmra.mxu0 %v1124
        %v1126 = vpop.f32.mrf.mxu0
        %v1127 = vadd.f32 %v1070, %v1126
        %v1128 = vand.u32 %v679, 4294901760
        %1129 = vmatmul.f32.gmra.mxu0 %v1128
        %v1130 = vpop.f32.mrf.mxu0
        %v1131 = vadd.f32 %v1074, %v1130
        %v1132 = vand.u32 %v682, 4294901760
        %1133 = vmatmul.f32.gmra.mxu0 %v1132
        %v1134 = vpop.f32.mrf.mxu0
        %v1135 = vadd.f32 %v1078, %v1134
        %v1136 = vand.u32 %v685, 4294901760
        %1137 = vmatmul.f32.gmra.mxu0 %v1136
        %v1138 = vpop.f32.mrf.mxu0
        %v1139 = vadd.f32 %v1082, %v1138
        %1140 = vdwg.mxu0
        %v1141 = vld [vmem:[%s2] sm:$0xff]
        %v1142 = vld [vmem:[%s2 + $0x8] sm:$0xff]
        %v1143 = vld [vmem:[%s2 + $0x10] sm:$0xff]
        %v1144 = vld [vmem:[%s2 + $0x18] sm:$0xff]
        %v1145 = vld [vmem:[%s3] sm:$0x1]
        %v1147 = vperm.slane %v1145, 0
        %vm1149 = vcmask 261120
        %v1151 = vsel %vm1149, %v1111, 0
        %v1154 = vsel %vm1149, %v1115, 0
        %v1157 = vsel %vm1149, %v1119, 0
        %v1160 = vsel %vm1149, %v1123, 0
        %v1163 = vsel %vm1149, %v1127, 0
        %v1166 = vsel %vm1149, %v1131, 0
        %v1169 = vsel %vm1149, %v1135, 0
        %v1172 = vsel %vm1149, %v1139, 0
        %1174 = vmatpush.msra.mxu0 0.0
        %1175 = vmatpush.msra.mxu0 0.0
        %1176 = vmatpush.msra.mxu0 0.0
        %1177 = vmatpush.msra.mxu0 0.0
        %1178 = vmatpush.msra.mxu0 0.0
        %1179 = vmatpush.msra.mxu0 0.0
        %1180 = vmatpush.msra.mxu0 0.0
        %1181 = vmatpush.msra.mxu0 0.0
        %1182 = vmatpush.msra.mxu0 0.0
        %1183 = vmatpush.msra.mxu0 0.0
        %1184 = vmatpush.msra.mxu0 0.0
        %1185 = vmatpush.msra.mxu0 0.0
        %v1186 = vand.u32 %v1144, 4294901760
        %1187 = vmatpush.msra.mxu0 %v1186
        %v1188 = vand.u32 %v1143, 4294901760
        %1189 = vmatpush.msra.mxu0 %v1188
        %v1190 = vand.u32 %v1142, 4294901760
        %1191 = vmatpush.msra.mxu0 %v1190
        %v1192 = vand.u32 %v1141, 4294901760
        %1193 = vmatpush.msra.mxu0 %v1192
        %v1194 = vand.u32 %v1151, 4294901760
        %v1195 = vsub.f32 %v1151, %v1194
        %v1196 = vand.u32 %v1195, 4294901760
        %v1197 = vsub.f32 %v1195, %v1196
        %v1198 = vand.u32 %v1197, 4294901760
        %1199 = vmatmul.f32.gmra.mxu0 %v1198
        %v1200 = vpop.f32.mrf.mxu0
        %v1201 = vadd.f32 %v1147, %v1200
        %v1202 = vand.u32 %v1154, 4294901760
        %v1203 = vsub.f32 %v1154, %v1202
        %v1204 = vand.u32 %v1203, 4294901760
        %v1205 = vsub.f32 %v1203, %v1204
        %v1206 = vand.u32 %v1205, 4294901760
        %1207 = vmatmul.f32.gmra.mxu0 %v1206
        %v1208 = vpop.f32.mrf.mxu0
        %v1209 = vadd.f32 %v1147, %v1208
        %v1210 = vand.u32 %v1157, 4294901760
        %v1211 = vsub.f32 %v1157, %v1210
        %v1212 = vand.u32 %v1211, 4294901760
        %v1213 = vsub.f32 %v1211, %v1212
        %v1214 = vand.u32 %v1213, 4294901760
        %1215 = vmatmul.f32.gmra.mxu0 %v1214
        %v1216 = vpop.f32.mrf.mxu0
        %v1217 = vadd.f32 %v1147, %v1216
        %v1218 = vand.u32 %v1160, 4294901760
        %v1219 = vsub.f32 %v1160, %v1218
        %v1220 = vand.u32 %v1219, 4294901760
        %v1221 = vsub.f32 %v1219, %v1220
        %v1222 = vand.u32 %v1221, 4294901760
        %1223 = vmatmul.f32.gmra.mxu0 %v1222
        %v1224 = vpop.f32.mrf.mxu0
        %v1225 = vadd.f32 %v1147, %v1224
        %v1226 = vand.u32 %v1163, 4294901760
        %v1227 = vsub.f32 %v1163, %v1226
        %v1228 = vand.u32 %v1227, 4294901760
        %v1229 = vsub.f32 %v1227, %v1228
        %v1230 = vand.u32 %v1229, 4294901760
        %1231 = vmatmul.f32.gmra.mxu0 %v1230
        %v1232 = vpop.f32.mrf.mxu0
        %v1233 = vadd.f32 %v1147, %v1232
        %v1234 = vand.u32 %v1166, 4294901760
        %v1235 = vsub.f32 %v1166, %v1234
        %v1236 = vand.u32 %v1235, 4294901760
        %v1237 = vsub.f32 %v1235, %v1236
        %v1238 = vand.u32 %v1237, 4294901760
        %1239 = vmatmul.f32.gmra.mxu0 %v1238
        %v1240 = vpop.f32.mrf.mxu0
        %v1241 = vadd.f32 %v1147, %v1240
        %v1242 = vand.u32 %v1169, 4294901760
        %v1243 = vsub.f32 %v1169, %v1242
        %v1244 = vand.u32 %v1243, 4294901760
        %v1245 = vsub.f32 %v1243, %v1244
        %v1246 = vand.u32 %v1245, 4294901760
        %1247 = vmatmul.f32.gmra.mxu0 %v1246
        %v1248 = vpop.f32.mrf.mxu0
        %v1249 = vadd.f32 %v1147, %v1248
        %v1250 = vand.u32 %v1172, 4294901760
        %v1251 = vsub.f32 %v1172, %v1250
        %v1252 = vand.u32 %v1251, 4294901760
        %v1253 = vsub.f32 %v1251, %v1252
        %v1254 = vand.u32 %v1253, 4294901760
        %1255 = vmatmul.f32.gmra.mxu0 %v1254
        %v1256 = vpop.f32.mrf.mxu0
        %v1257 = vadd.f32 %v1147, %v1256
        %1258 = vdwg.mxu0
        %1259 = vmatpush.msra.mxu0 0.0
        %1260 = vmatpush.msra.mxu0 0.0
        %1261 = vmatpush.msra.mxu0 0.0
        %1262 = vmatpush.msra.mxu0 0.0
        %1263 = vmatpush.msra.mxu0 0.0
        %1264 = vmatpush.msra.mxu0 0.0
        %1265 = vmatpush.msra.mxu0 0.0
        %1266 = vmatpush.msra.mxu0 0.0
        %1267 = vmatpush.msra.mxu0 0.0
        %1268 = vmatpush.msra.mxu0 0.0
        %1269 = vmatpush.msra.mxu0 0.0
        %1270 = vmatpush.msra.mxu0 0.0
        %v1271 = vand.u32 %v1144, 4294901760
        %v1272 = vsub.f32 %v1144, %v1271
        %v1273 = vand.u32 %v1272, 4294901760
        %v1274 = vsub.f32 %v1272, %v1273
        %v1275 = vand.u32 %v1274, 4294901760
        %1276 = vmatpush.msra.mxu0 %v1275
        %v1277 = vand.u32 %v1143, 4294901760
        %v1278 = vsub.f32 %v1143, %v1277
        %v1279 = vand.u32 %v1278, 4294901760
        %v1280 = vsub.f32 %v1278, %v1279
        %v1281 = vand.u32 %v1280, 4294901760
        %1282 = vmatpush.msra.mxu0 %v1281
        %v1283 = vand.u32 %v1142, 4294901760
        %v1284 = vsub.f32 %v1142, %v1283
        %v1285 = vand.u32 %v1284, 4294901760
        %v1286 = vsub.f32 %v1284, %v1285
        %v1287 = vand.u32 %v1286, 4294901760
        %1288 = vmatpush.msra.mxu0 %v1287
        %v1289 = vand.u32 %v1141, 4294901760
        %v1290 = vsub.f32 %v1141, %v1289
        %v1291 = vand.u32 %v1290, 4294901760
        %v1292 = vsub.f32 %v1290, %v1291
        %v1293 = vand.u32 %v1292, 4294901760
        %1294 = vmatpush.msra.mxu0 %v1293
        %v1295 = vand.u32 %v1151, 4294901760
        %1296 = vmatmul.f32.gmra.mxu0 %v1295
        %v1297 = vpop.f32.mrf.mxu0
        %v1298 = vadd.f32 %v1201, %v1297
        %v1299 = vand.u32 %v1154, 4294901760
        %1300 = vmatmul.f32.gmra.mxu0 %v1299
        %v1301 = vpop.f32.mrf.mxu0
        %v1302 = vadd.f32 %v1209, %v1301
        %v1303 = vand.u32 %v1157, 4294901760
        %1304 = vmatmul.f32.gmra.mxu0 %v1303
        %v1305 = vpop.f32.mrf.mxu0
        %v1306 = vadd.f32 %v1217, %v1305
        %v1307 = vand.u32 %v1160, 4294901760
        %1308 = vmatmul.f32.gmra.mxu0 %v1307
        %v1309 = vpop.f32.mrf.mxu0
        %v1310 = vadd.f32 %v1225, %v1309
        %v1311 = vand.u32 %v1163, 4294901760
        %1312 = vmatmul.f32.gmra.mxu0 %v1311
        %v1313 = vpop.f32.mrf.mxu0
        %v1314 = vadd.f32 %v1233, %v1313
        %v1315 = vand.u32 %v1166, 4294901760
        %1316 = vmatmul.f32.gmra.mxu0 %v1315
        %v1317 = vpop.f32.mrf.mxu0
        %v1318 = vadd.f32 %v1241, %v1317
        %v1319 = vand.u32 %v1169, 4294901760
        %1320 = vmatmul.f32.gmra.mxu0 %v1319
        %v1321 = vpop.f32.mrf.mxu0
        %v1322 = vadd.f32 %v1249, %v1321
        %v1323 = vand.u32 %v1172, 4294901760
        %1324 = vmatmul.f32.gmra.mxu0 %v1323
        %v1325 = vpop.f32.mrf.mxu0
        %v1326 = vadd.f32 %v1257, %v1325
        %1327 = vdwg.mxu0
        %1328 = vmatpush.msra.mxu0 0.0
        %1329 = vmatpush.msra.mxu0 0.0
        %1330 = vmatpush.msra.mxu0 0.0
        %1331 = vmatpush.msra.mxu0 0.0
        %1332 = vmatpush.msra.mxu0 0.0
        %1333 = vmatpush.msra.mxu0 0.0
        %1334 = vmatpush.msra.mxu0 0.0
        %1335 = vmatpush.msra.mxu0 0.0
        %1336 = vmatpush.msra.mxu0 0.0
        %1337 = vmatpush.msra.mxu0 0.0
        %1338 = vmatpush.msra.mxu0 0.0
        %1339 = vmatpush.msra.mxu0 0.0
        %v1340 = vand.u32 %v1144, 4294901760
        %v1341 = vsub.f32 %v1144, %v1340
        %1342 = vmatpush.msra.mxu0 %v1341
        %v1343 = vand.u32 %v1143, 4294901760
        %v1344 = vsub.f32 %v1143, %v1343
        %1345 = vmatpush.msra.mxu0 %v1344
        %v1346 = vand.u32 %v1142, 4294901760
        %v1347 = vsub.f32 %v1142, %v1346
        %1348 = vmatpush.msra.mxu0 %v1347
        %v1349 = vand.u32 %v1141, 4294901760
        %v1350 = vsub.f32 %v1141, %v1349
        %1351 = vmatpush.msra.mxu0 %v1350
        %v1352 = vand.u32 %v1151, 4294901760
        %v1353 = vsub.f32 %v1151, %v1352
        %1354 = vmatmul.f32.gmra.mxu0 %v1353
        %v1355 = vpop.f32.mrf.mxu0
        %v1356 = vadd.f32 %v1298, %v1355
        %v1357 = vand.u32 %v1154, 4294901760
        %v1358 = vsub.f32 %v1154, %v1357
        %1359 = vmatmul.f32.gmra.mxu0 %v1358
        %v1360 = vpop.f32.mrf.mxu0
        %v1361 = vadd.f32 %v1302, %v1360
        %v1362 = vand.u32 %v1157, 4294901760
        %v1363 = vsub.f32 %v1157, %v1362
        %1364 = vmatmul.f32.gmra.mxu0 %v1363
        %v1365 = vpop.f32.mrf.mxu0
        %v1366 = vadd.f32 %v1306, %v1365
        %v1367 = vand.u32 %v1160, 4294901760
        %v1368 = vsub.f32 %v1160, %v1367
        %1369 = vmatmul.f32.gmra.mxu0 %v1368
        %v1370 = vpop.f32.mrf.mxu0
        %v1371 = vadd.f32 %v1310, %v1370
        %v1372 = vand.u32 %v1163, 4294901760
        %v1373 = vsub.f32 %v1163, %v1372
        %1374 = vmatmul.f32.gmra.mxu0 %v1373
        %v1375 = vpop.f32.mrf.mxu0
        %v1376 = vadd.f32 %v1314, %v1375
        %v1377 = vand.u32 %v1166, 4294901760
        %v1378 = vsub.f32 %v1166, %v1377
        %1379 = vmatmul.f32.gmra.mxu0 %v1378
        %v1380 = vpop.f32.mrf.mxu0
        %v1381 = vadd.f32 %v1318, %v1380
        %v1382 = vand.u32 %v1169, 4294901760
        %v1383 = vsub.f32 %v1169, %v1382
        %1384 = vmatmul.f32.gmra.mxu0 %v1383
        %v1385 = vpop.f32.mrf.mxu0
        %v1386 = vadd.f32 %v1322, %v1385
        %v1387 = vand.u32 %v1172, 4294901760
        %v1388 = vsub.f32 %v1172, %v1387
        %1389 = vmatmul.f32.gmra.mxu0 %v1388
        %v1390 = vpop.f32.mrf.mxu0
        %v1391 = vadd.f32 %v1326, %v1390
        %1392 = vdwg.mxu0
        %1393 = vmatpush.msra.mxu0 0.0
        %1394 = vmatpush.msra.mxu0 0.0
        %1395 = vmatpush.msra.mxu0 0.0
        %1396 = vmatpush.msra.mxu0 0.0
        %1397 = vmatpush.msra.mxu0 0.0
        %1398 = vmatpush.msra.mxu0 0.0
        %1399 = vmatpush.msra.mxu0 0.0
        %1400 = vmatpush.msra.mxu0 0.0
        %1401 = vmatpush.msra.mxu0 0.0
        %1402 = vmatpush.msra.mxu0 0.0
        %1403 = vmatpush.msra.mxu0 0.0
        %1404 = vmatpush.msra.mxu0 0.0
        %v1405 = vand.u32 %v1144, 4294901760
        %1406 = vmatpush.msra.mxu0 %v1405
        %v1407 = vand.u32 %v1143, 4294901760
        %1408 = vmatpush.msra.mxu0 %v1407
        %v1409 = vand.u32 %v1142, 4294901760
        %1410 = vmatpush.msra.mxu0 %v1409
        %v1411 = vand.u32 %v1141, 4294901760
        %1412 = vmatpush.msra.mxu0 %v1411
        %v1413 = vand.u32 %v1151, 4294901760
        %v1414 = vsub.f32 %v1151, %v1413
        %v1415 = vand.u32 %v1414, 4294901760
        %1416 = vmatmul.f32.gmra.mxu0 %v1415
        %v1417 = vpop.f32.mrf.mxu0
        %v1418 = vadd.f32 %v1356, %v1417
        %v1419 = vand.u32 %v1154, 4294901760
        %v1420 = vsub.f32 %v1154, %v1419
        %v1421 = vand.u32 %v1420, 4294901760
        %1422 = vmatmul.f32.gmra.mxu0 %v1421
        %v1423 = vpop.f32.mrf.mxu0
        %v1424 = vadd.f32 %v1361, %v1423
        %v1425 = vand.u32 %v1157, 4294901760
        %v1426 = vsub.f32 %v1157, %v1425
        %v1427 = vand.u32 %v1426, 4294901760
        %1428 = vmatmul.f32.gmra.mxu0 %v1427
        %v1429 = vpop.f32.mrf.mxu0
        %v1430 = vadd.f32 %v1366, %v1429
        %v1431 = vand.u32 %v1160, 4294901760
        %v1432 = vsub.f32 %v1160, %v1431
        %v1433 = vand.u32 %v1432, 4294901760
        %1434 = vmatmul.f32.gmra.mxu0 %v1433
        %v1435 = vpop.f32.mrf.mxu0
        %v1436 = vadd.f32 %v1371, %v1435
        %v1437 = vand.u32 %v1163, 4294901760
        %v1438 = vsub.f32 %v1163, %v1437
        %v1439 = vand.u32 %v1438, 4294901760
        %1440 = vmatmul.f32.gmra.mxu0 %v1439
        %v1441 = vpop.f32.mrf.mxu0
        %v1442 = vadd.f32 %v1376, %v1441
        %v1443 = vand.u32 %v1166, 4294901760
        %v1444 = vsub.f32 %v1166, %v1443
        %v1445 = vand.u32 %v1444, 4294901760
        %1446 = vmatmul.f32.gmra.mxu0 %v1445
        %v1447 = vpop.f32.mrf.mxu0
        %v1448 = vadd.f32 %v1381, %v1447
        %v1449 = vand.u32 %v1169, 4294901760
        %v1450 = vsub.f32 %v1169, %v1449
        %v1451 = vand.u32 %v1450, 4294901760
        %1452 = vmatmul.f32.gmra.mxu0 %v1451
        %v1453 = vpop.f32.mrf.mxu0
        %v1454 = vadd.f32 %v1386, %v1453
        %v1455 = vand.u32 %v1172, 4294901760
        %v1456 = vsub.f32 %v1172, %v1455
        %v1457 = vand.u32 %v1456, 4294901760
        %1458 = vmatmul.f32.gmra.mxu0 %v1457
        %v1459 = vpop.f32.mrf.mxu0
        %v1460 = vadd.f32 %v1391, %v1459
        %1461 = vdwg.mxu0
        %1462 = vmatpush.msra.mxu0 0.0
        %1463 = vmatpush.msra.mxu0 0.0
        %1464 = vmatpush.msra.mxu0 0.0
        %1465 = vmatpush.msra.mxu0 0.0
        %1466 = vmatpush.msra.mxu0 0.0
        %1467 = vmatpush.msra.mxu0 0.0
        %1468 = vmatpush.msra.mxu0 0.0
        %1469 = vmatpush.msra.mxu0 0.0
        %1470 = vmatpush.msra.mxu0 0.0
        %1471 = vmatpush.msra.mxu0 0.0
        %1472 = vmatpush.msra.mxu0 0.0
        %1473 = vmatpush.msra.mxu0 0.0
        %v1474 = vand.u32 %v1144, 4294901760
        %v1475 = vsub.f32 %v1144, %v1474
        %v1476 = vand.u32 %v1475, 4294901760
        %1477 = vmatpush.msra.mxu0 %v1476
        %v1478 = vand.u32 %v1143, 4294901760
        %v1479 = vsub.f32 %v1143, %v1478
        %v1480 = vand.u32 %v1479, 4294901760
        %1481 = vmatpush.msra.mxu0 %v1480
        %v1482 = vand.u32 %v1142, 4294901760
        %v1483 = vsub.f32 %v1142, %v1482
        %v1484 = vand.u32 %v1483, 4294901760
        %1485 = vmatpush.msra.mxu0 %v1484
        %v1486 = vand.u32 %v1141, 4294901760
        %v1487 = vsub.f32 %v1141, %v1486
        %v1488 = vand.u32 %v1487, 4294901760
        %1489 = vmatpush.msra.mxu0 %v1488
        %v1490 = vand.u32 %v1151, 4294901760
        %1491 = vmatmul.f32.gmra.mxu0 %v1490
        %v1492 = vpop.f32.mrf.mxu0
        %v1493 = vadd.f32 %v1418, %v1492
        %v1494 = vand.u32 %v1154, 4294901760
        %1495 = vmatmul.f32.gmra.mxu0 %v1494
        %v1496 = vpop.f32.mrf.mxu0
        %v1497 = vadd.f32 %v1424, %v1496
        %v1498 = vand.u32 %v1157, 4294901760
        %1499 = vmatmul.f32.gmra.mxu0 %v1498
        %v1500 = vpop.f32.mrf.mxu0
        %v1501 = vadd.f32 %v1430, %v1500
        %v1502 = vand.u32 %v1160, 4294901760
        %1503 = vmatmul.f32.gmra.mxu0 %v1502
        %v1504 = vpop.f32.mrf.mxu0
        %v1505 = vadd.f32 %v1436, %v1504
        %v1506 = vand.u32 %v1163, 4294901760
        %1507 = vmatmul.f32.gmra.mxu0 %v1506
        %v1508 = vpop.f32.mrf.mxu0
        %v1509 = vadd.f32 %v1442, %v1508
        %v1510 = vand.u32 %v1166, 4294901760
        %1511 = vmatmul.f32.gmra.mxu0 %v1510
        %v1512 = vpop.f32.mrf.mxu0
        %v1513 = vadd.f32 %v1448, %v1512
        %v1514 = vand.u32 %v1169, 4294901760
        %1515 = vmatmul.f32.gmra.mxu0 %v1514
        %v1516 = vpop.f32.mrf.mxu0
        %v1517 = vadd.f32 %v1454, %v1516
        %v1518 = vand.u32 %v1172, 4294901760
        %1519 = vmatmul.f32.gmra.mxu0 %v1518
        %v1520 = vpop.f32.mrf.mxu0
        %v1521 = vadd.f32 %v1460, %v1520
        %1522 = vdwg.mxu0
        %1523 = vmatpush.msra.mxu0 0.0
        %1524 = vmatpush.msra.mxu0 0.0
        %1525 = vmatpush.msra.mxu0 0.0
        %1526 = vmatpush.msra.mxu0 0.0
        %1527 = vmatpush.msra.mxu0 0.0
        %1528 = vmatpush.msra.mxu0 0.0
        %1529 = vmatpush.msra.mxu0 0.0
        %1530 = vmatpush.msra.mxu0 0.0
        %1531 = vmatpush.msra.mxu0 0.0
        %1532 = vmatpush.msra.mxu0 0.0
        %1533 = vmatpush.msra.mxu0 0.0
        %1534 = vmatpush.msra.mxu0 0.0
        %v1535 = vand.u32 %v1144, 4294901760
        %1536 = vmatpush.msra.mxu0 %v1535
        %v1537 = vand.u32 %v1143, 4294901760
        %1538 = vmatpush.msra.mxu0 %v1537
        %v1539 = vand.u32 %v1142, 4294901760
        %1540 = vmatpush.msra.mxu0 %v1539
        %v1541 = vand.u32 %v1141, 4294901760
        %1542 = vmatpush.msra.mxu0 %v1541
        %v1543 = vand.u32 %v1151, 4294901760
        %1544 = vmatmul.f32.gmra.mxu0 %v1543
        %v1545 = vpop.f32.mrf.mxu0
        %v1546 = vadd.f32 %v1493, %v1545
        %v1547 = vand.u32 %v1154, 4294901760
        %1548 = vmatmul.f32.gmra.mxu0 %v1547
        %v1549 = vpop.f32.mrf.mxu0
        %v1550 = vadd.f32 %v1497, %v1549
        %v1551 = vand.u32 %v1157, 4294901760
        %1552 = vmatmul.f32.gmra.mxu0 %v1551
        %v1553 = vpop.f32.mrf.mxu0
        %v1554 = vadd.f32 %v1501, %v1553
        %v1555 = vand.u32 %v1160, 4294901760
        %1556 = vmatmul.f32.gmra.mxu0 %v1555
        %v1557 = vpop.f32.mrf.mxu0
        %v1558 = vadd.f32 %v1505, %v1557
        %v1559 = vand.u32 %v1163, 4294901760
        %1560 = vmatmul.f32.gmra.mxu0 %v1559
        %v1561 = vpop.f32.mrf.mxu0
        %v1562 = vadd.f32 %v1509, %v1561
        %v1563 = vand.u32 %v1166, 4294901760
        %1564 = vmatmul.f32.gmra.mxu0 %v1563
        %v1565 = vpop.f32.mrf.mxu0
        %v1566 = vadd.f32 %v1513, %v1565
        %v1567 = vand.u32 %v1169, 4294901760
        %1568 = vmatmul.f32.gmra.mxu0 %v1567
        %v1569 = vpop.f32.mrf.mxu0
        %v1570 = vadd.f32 %v1517, %v1569
        %v1571 = vand.u32 %v1172, 4294901760
        %1572 = vmatmul.f32.gmra.mxu0 %v1571
        %v1573 = vpop.f32.mrf.mxu0
        %v1574 = vadd.f32 %v1521, %v1573
        %1575 = vdwg.mxu0
        %v1576 = vmax.f32 %v1546, 0.0
        %v1577 = vmax.f32 %v1550, 0.0
        %v1578 = vmax.f32 %v1554, 0.0
        %v1579 = vmax.f32 %v1558, 0.0
        %v1580 = vmax.f32 %v1562, 0.0
        %v1581 = vmax.f32 %v1566, 0.0
        %v1582 = vmax.f32 %v1570, 0.0
        %v1583 = vmax.f32 %v1574, 0.0
        %1584 = vst [vmem:[%s235] sm:$0xff] %v1576
        %1585 = vst [vmem:[%s235 + $0x8] sm:$0xff] %v1577
        %1586 = vst [vmem:[%s235 + $0x10] sm:$0xff] %v1578
        %1587 = vst [vmem:[%s235 + $0x18] sm:$0xff] %v1579
        %1588 = vst [vmem:[%s235 + $0x20] sm:$0xff] %v1580
        %1589 = vst [vmem:[%s235 + $0x28] sm:$0xff] %v1581
        %1590 = vst [vmem:[%s235 + $0x30] sm:$0xff] %v1582
        %1591 = vst [vmem:[%s235 + $0x38] sm:$0xff] %v1583
        %s1592 = sand.u32 %s143, 1
        %s1593 = scalar_lea.sflag [#allocation4], %s1592
        %s1594 = sand.u32 %s143, 1
        %s1595 = smul.addr %s1594, 64
        %s1596 = scalar_lea.vmem [#allocation3], %s1595
        // Predicated region
        $region41: #{tpu_custom_call.1} parent=39 // pred_check
          %p1597 = pneg %p153
        $region42: #{tpu_custom_call.1} parent=39 // pred_check_branch
          %1599 = sbr.rel (%p1597) target = $region44
        $region43: #{tpu_custom_call.1} parent=39 // pred_region
          %s1600 = smul.u32 8, %s20
          %1602 = vsyncadd %s1593, 0
          %s1603 = smul.addr %s1600, 8
          %s1604 = scalar_lea.hbm %s5, %s1603
          %s1605 = sshll.u32 %s1596, 4
          %s1606 = int_to_ptr.vmem [resolvable:$true] %s1605
          %s1607 = sshll.u32 %s1604, 4
          %s1608 = int_to_ptr.hbm [resolvable:$true] %s1607
          %1613 = dma.vmem_to_hbm [thread:$0]  %s1606, 1024, %s1608, %s1593, 128, 128, 8
        $region44: #{tpu_custom_call.1} parent=39 // pred_fallthru
          _
      $region40: #{tpu_custom_call.1} parent=5 // pred_fallthru
        _
      %p1614 = scmp.le.s32.totalorder 2, %s15
      // Predicated region
      $region45: #{tpu_custom_call.1} parent=5 // pred_check
        %p1615 = pneg %p1614
      $region46: #{tpu_custom_call.1} parent=5 // pred_check_branch
        %1617 = sbr.rel (%p1615) target = $region48
      $region47: #{tpu_custom_call.1} parent=5 // pred_region
        %s1618 = ssub.s32 %s15, 2
        // Predicated region
        $region49: #{tpu_custom_call.1} parent=47 // pred_check
          %p1619 = pneg %p159
        $region50: #{tpu_custom_call.1} parent=47 // pred_check_branch
          %1621 = sbr.rel (%p1619) target = $region52
        $region51: #{tpu_custom_call.1} parent=47 // pred_region
          %s1622 = sand.u32 %s144, 1
          %s1623 = scalar_lea.sflag [#allocation4], %s1622
          %s1624 = sand.u32 %s144, 1
          %s1625 = smul.addr %s1624, 64
          %s1626 = scalar_lea.vmem [#allocation3], %s1625
          %1628 = dma.done %s1623, 1024
        $region52: #{tpu_custom_call.1} parent=47 // pred_fallthru
          _
      $region48: #{tpu_custom_call.1} parent=5 // pred_fallthru
        _
    $region6: #{tpu_custom_call.1} parent=1 // loop_footer
      %s19 = sadd.s32 1, %s15
    $region7: #{tpu_custom_call.1} parent=1 // loop_footer_branch
      %14 = sbr.rel target = $region3
    $region8: #{tpu_custom_call.1} parent=1 // loop_exit
      _
    %1629 = vsyncpa [#allocation4], 1
    %s1630 = scalar_lea.sflag [#allocation4], 1
    %1631 = vsyncpa %s1630, 1

</llo_original>
